<compile_context>
chip_gen: v6e
topology: v6e:2x2x1
jax: 0.10.0
libtpu: 0.0.40
codegen_flags: <defaults>
</compile_context>

<pallas_src>
import functools

import jax
import jax.numpy as jnp
import numpy as np
from jax.experimental import pallas as pl
from jax.experimental.pallas import tpu as pltpu


def _mha_kernel(x_ref, wqkv_ref, bqkv_ref, wo_ref, bo_ref, *rest,
                d_k, tq, return_attention):
    """Grid = (batch, head, q_tile); one step = one (head, q-row-tile)."""
    if return_attention:
        out_ref, attn_ref, qkv_sc = rest
    else:
        out_ref, qkv_sc = rest
        attn_ref = None

    h = pl.program_id(1)
    qi = pl.program_id(2)
    cdt = wqkv_ref.dtype                       # MXU compute dtype (f32 or bf16)
    f32 = jnp.float32

    # Fused per-head Q/K/V projection, computed once per (batch, head) and
    # reused across q-tiles.  (1/sqrt(d_k) already folded into Q host-side.)
    @pl.when(qi == 0)
    def _():
        w_h = wqkv_ref[h]                                       # (D, 3*d_k)
        b_h = bqkv_ref[h]                                       # (1, 3*d_k) f32
        proj = jnp.dot(x_ref[0], w_h, preferred_element_type=f32) + b_h
        qkv_sc[...] = proj.astype(qkv_sc.dtype)                 # (S, 3*d_k)

    q_start = pl.multiple_of(qi * tq, tq)
    q = qkv_sc[pl.ds(q_start, tq), 0:d_k]                       # (tq, d_k)
    k = qkv_sc[:, d_k:2 * d_k]                                  # (S,  d_k)
    v = qkv_sc[:, 2 * d_k:3 * d_k]                              # (S,  d_k)

    # Scores + numerically-stable softmax (f32 accumulation / f32 sums).
    scores = jnp.einsum('qd,kd->qk', q, k, preferred_element_type=f32)  # (tq, S)
    m = jnp.max(scores, axis=-1, keepdims=True)
    if wqkv_ref.dtype == jnp.bfloat16:
        # bf16 exp (EUP throughput on v6e/v7x) + approx reciprocal.
        p = jnp.exp((scores - m).astype(jnp.bfloat16)).astype(f32)
        attn = p * pl.reciprocal(jnp.sum(p, axis=-1, keepdims=True), approx=True)
    else:
        p = jnp.exp(scores - m)
        attn = p * pl.reciprocal(jnp.sum(p, axis=-1, keepdims=True), approx=False)

    if attn_ref is not None:
        attn_ref[0, 0] = attn.astype(attn_ref.dtype)

    # Context + this head's slice of the output projection, accumulated into
    # the resident f32 output block (avoids the concat-heads relayout).
    ctx = jnp.dot(attn.astype(cdt), v, preferred_element_type=f32)          # (tq, d_k)
    o_h = jnp.dot(ctx.astype(cdt), wo_ref[h], preferred_element_type=f32)   # (tq, D)

    rows = pl.ds(q_start, tq)

    @pl.when(h == 0)
    def _():
        out_ref[0, rows, :] = o_h + bo_ref[...]

    @pl.when(h != 0)
    def _():
        out_ref[0, rows, :] = out_ref[0, rows, :] + o_h


def _pick_q_tile(S):
    """q-tile: <=256 rows (MXU M dim on v6e/v7x), multiple of 8, divides S."""
    if S <= 256:
        return S
    for t in (256, 128, 64, 32, 16, 8):
        if S % t == 0:
            return t
    return S


def _vmem_limit_bytes(block_bytes, tmp_bytes):
    try:
        cap = pltpu.get_tpu_info().vmem_capacity_bytes        # 64 MiB v7x, 128 MiB v5e/v6e
    except Exception:
        cap = 128 << 20
    budget = int(cap * 0.8)
    want = int(2 * block_bytes + 2 * tmp_bytes + (4 << 20))
    return max(32 << 20, min(want, budget))


def multi_head_attention(x, params, n_heads, *, mxu_dtype=jnp.bfloat16,
                         attn_dtype=jnp.float32, return_attention=True):
    """x: (B, S, D) float32. params: torch-layout Linear weights (out, in)."""
    B, S, D = x.shape
    assert D % n_heads == 0
    d_k = D // n_heads
    tq = _pick_q_tile(S)
    n_q = S // tq
    scale = jnp.float32(1.0 / np.sqrt(d_k))

    # ---- host-side packing: per-head, pre-transposed (in, out), scale folded ----
    def split_heads_w(w_t):                      # (D, D) -> (H, D, d_k)
        return jnp.transpose(w_t.reshape(D, n_heads, d_k), (1, 0, 2))

    def split_heads_b(b):                        # (D,) -> (H, 1, d_k)
        return b.reshape(n_heads, 1, d_k)

    wqkv = jnp.concatenate([split_heads_w(params["wq"].T * scale),
                            split_heads_w(params["wk"].T),
                            split_heads_w(params["wv"].T)], axis=2)     # (H, D, 3*d_k)
    bqkv = jnp.concatenate([split_heads_b(params["bq"] * scale),
                            split_heads_b(params["bk"]),
                            split_heads_b(params["bv"])], axis=2)       # (H, 1, 3*d_k)
    wo = params["wo"].T.reshape(n_heads, d_k, D)                        # (H, d_k, D)
    bo = params["bo"][None, :]                                          # (1, D)

    x_c = x.astype(mxu_dtype)
    wqkv = wqkv.astype(mxu_dtype)
    wo = wo.astype(mxu_dtype)
    bqkv = bqkv.astype(jnp.float32)
    bo = bo.astype(jnp.float32)

    kernel = functools.partial(_mha_kernel, d_k=d_k, tq=tq,
                               return_attention=return_attention)

    # ---- VMEM budget (generation-aware) + cost estimate ----
    itm = jnp.dtype(mxu_dtype).itemsize
    a_itm = jnp.dtype(attn_dtype).itemsize
    block_bytes = (S * D * itm                      # x block
                   + 4 * D * D * itm                # Wqkv + Wo (single-buffered)
                   + 3 * D * 4 + D * 4              # biases
                   + S * D * 4                      # out block (resident f32)
                   + (tq * S * a_itm if return_attention else 0)
                   + S * 3 * d_k * itm)             # per-head QKV scratch
    tmp_bytes = (3 * tq * S + tq * D + S * 3 * d_k) * 4
    vmem_limit = _vmem_limit_bytes(block_bytes, tmp_bytes)

    flops = (2 * B * S * D * 3 * D            # QKV projection
             + 4 * B * n_heads * S * S * d_k  # QK^T + PV
             + 2 * B * S * D * D)             # output projection
    bytes_accessed = (B * S * D * itm + 4 * D * D * itm + 4 * D * 4
                      + B * S * D * 4
                      + (B * n_heads * S * S * a_itm if return_attention else 0))
    cost = pl.CostEstimate(flops=flops, transcendentals=B * n_heads * S * S,
                           bytes_accessed=bytes_accessed)

    out_struct = jax.ShapeDtypeStruct((B, S, D), jnp.float32)
    out_spec = pl.BlockSpec((1, S, D), lambda b, h, q: (b, 0, 0))
    if return_attention:
        out_shape = (out_struct,
                     jax.ShapeDtypeStruct((B, n_heads, S, S), attn_dtype))
        out_specs = [out_spec,
                     pl.BlockSpec((1, 1, tq, S), lambda b, h, q: (b, h, q, 0))]
    else:
        out_shape = out_struct
        out_specs = out_spec

    def build(single_buffer_weights):
        wmode = pl.Buffered(1) if single_buffer_weights else None
        in_specs = [
            pl.BlockSpec((1, S, D), lambda b, h, q: (b, 0, 0)),              # x
            pl.BlockSpec((n_heads, D, 3 * d_k), lambda b, h, q: (0, 0, 0),
                         pipeline_mode=wmode),                               # Wqkv
            pl.BlockSpec((n_heads, 1, 3 * d_k), lambda b, h, q: (0, 0, 0),
                         pipeline_mode=wmode),                               # bqkv
            pl.BlockSpec((n_heads, d_k, D), lambda b, h, q: (0, 0, 0),
                         pipeline_mode=wmode),                               # Wo
            pl.BlockSpec((1, D), lambda b, h, q: (0, 0),
                         pipeline_mode=wmode),                               # bo
        ]
        return pl.pallas_call(
            kernel,
            out_shape=out_shape,
            grid_spec=pltpu.PrefetchScalarGridSpec(
                num_scalar_prefetch=0,
                grid=(B, n_heads, n_q),
                in_specs=in_specs,
                out_specs=out_specs,
                scratch_shapes=[pltpu.VMEM((S, 3 * d_k), mxu_dtype)]),
            compiler_params=pltpu.CompilerParams(
                dimension_semantics=("parallel", "arbitrary", "arbitrary"),
                vmem_limit_bytes=vmem_limit),
            cost_estimate=cost,
        )

    try:
        res = build(True)(x_c, wqkv, bqkv, wo, bo)
    except Exception:
        # TODO(synk): fallback for Pallas builds that reject pl.Buffered(1) on
        # grid-invariant inputs; semantics identical, just default buffering.
        res = build(False)(x_c, wqkv, bqkv, wo, bo)

    if return_attention:
        out, attn = res
        return out, attn
    return res


def reference(x, params, n_heads):
    """Pure-JAX reference matching the PyTorch forward (mask=None)."""
    B, S, D = x.shape
    d_k = D // n_heads

    def lin(t, w, b):
        return jnp.einsum("bsd,od->bso", t, w) + b

    q = lin(x, params["wq"], params["bq"]).reshape(B, S, n_heads, d_k).transpose(0, 2, 1, 3)
    k = lin(x, params["wk"], params["bk"]).reshape(B, S, n_heads, d_k).transpose(0, 2, 1, 3)
    v = lin(x, params["wv"], params["bv"]).reshape(B, S, n_heads, d_k).transpose(0, 2, 1, 3)

    scores = jnp.einsum("bhqd,bhkd->bhqk", q, k) / jnp.sqrt(jnp.float32(d_k))
    attn = jax.nn.softmax(scores, axis=-1)
    out = jnp.einsum("bhqk,bhkd->bhqd", attn, v).transpose(0, 2, 1, 3).reshape(B, S, D)
    out = lin(out, params["wo"], params["bo"])
    return out, attn


if __name__ == "__main__":
    # TODO(synk): the PyTorch forward's `mask` argument is not exercised
    # (mask=None path only).
    B, S, d_model, n_heads = 2, 8, 32, 4

    key = jax.random.PRNGKey(0)
    keys = jax.random.split(key, 10)

    init_scale = 1.0 / np.sqrt(d_model)
    params = {
        "wq": jax.random.uniform(keys[0], (d_model, d_model), jnp.float32, -init_scale, init_scale),
        "bq": jax.random.uniform(keys[1], (d_model,), jnp.float32, -init_scale, init_scale),
        "wk": jax.random.uniform(keys[2], (d_model, d_model), jnp.float32, -init_scale, init_scale),
        "bk": jax.random.uniform(keys[3], (d_model,), jnp.float32, -init_scale, init_scale),
        "wv": jax.random.uniform(keys[4], (d_model, d_model), jnp.float32, -init_scale, init_scale),
        "bv": jax.random.uniform(keys[5], (d_model,), jnp.float32, -init_scale, init_scale),
        "wo": jax.random.uniform(keys[6], (d_model, d_model), jnp.float32, -init_scale, init_scale),
        "bo": jax.random.uniform(keys[7], (d_model,), jnp.float32, -init_scale, init_scale),
    }
    x = jax.random.normal(keys[8], (B, S, d_model), jnp.float32)

    out_gold, attn_gold = reference(x, params, n_heads)

    # Exact f32 MXU path (reference-accurate).
    out, attn = multi_head_attention(x, params, n_heads, mxu_dtype=jnp.float32)
    jax.block_until_ready((out, attn))
    np.testing.assert_allclose(np.asarray(out), np.asarray(out_gold), rtol=2e-5, atol=2e-5)
    np.testing.assert_allclose(np.asarray(attn), np.asarray(attn_gold), rtol=2e-5, atol=2e-5)

    # bf16 MXU default path (v5e/v6e/v7x throughput), f32 accumulation/softmax sums.
    out_bf, attn_bf = multi_head_attention(x, params, n_heads)
    jax.block_until_ready((out_bf, attn_bf))
    np.testing.assert_allclose(np.asarray(out_bf), np.asarray(out_gold), rtol=5e-2, atol=5e-2)
    np.testing.assert_allclose(np.asarray(attn_bf), np.asarray(attn_gold), rtol=5e-2, atol=5e-2)

    # Attention-map-free path: skips the O(H*S^2) HBM writeback entirely.
    out_only = multi_head_attention(x, params, n_heads, mxu_dtype=jnp.float32,
                                    return_attention=False)
    jax.block_until_ready(out_only)
    np.testing.assert_allclose(np.asarray(out_only), np.asarray(out_gold), rtol=2e-5, atol=2e-5)

    print("KERNEL_OK")
</pallas_src>

<mosaic_0001>
module attributes {stable_mosaic.version = 11 : i64} {
  func.func @_mha_kernel(%arg0: i32, %arg1: i32, %arg2: i32, %arg3: memref<1x8x32xf32, #tpu.memory_space<vmem>>, %arg4: memref<4x32x24xf32, #tpu.memory_space<vmem>>, %arg5: memref<4x1x24xf32, #tpu.memory_space<vmem>>, %arg6: memref<4x8x32xf32, #tpu.memory_space<vmem>>, %arg7: memref<1x32xf32, #tpu.memory_space<vmem>>, %arg8: memref<1x8x32xf32, #tpu.memory_space<vmem>>, %arg9: memref<1x1x8x8xf32, #tpu.memory_space<vmem>>, %arg10: memref<8x24xf32, #tpu.memory_space<vmem>>) attributes {dimension_semantics = [#tpu.dimension_semantics<parallel>, #tpu.dimension_semantics<arbitrary>, #tpu.dimension_semantics<arbitrary>], iteration_bounds = array<i64: 2, 4, 1>, scalar_prefetch = 0 : i64, scratch_operands = 1 : i64, tpu.core_type = #tpu.core_type<tc>, window_params = [{transform_indices = @transform_0, window_bounds = array<i64: 1, 8, 32>}, {pipeline_mode = #tpu.pipeline_mode<synchronous>, transform_indices = @transform_1, window_bounds = array<i64: 4, 32, 24>}, {pipeline_mode = #tpu.pipeline_mode<synchronous>, transform_indices = @transform_2, window_bounds = array<i64: 4, 1, 24>}, {pipeline_mode = #tpu.pipeline_mode<synchronous>, transform_indices = @transform_3, window_bounds = array<i64: 4, 8, 32>}, {pipeline_mode = #tpu.pipeline_mode<synchronous>, transform_indices = @transform_4, window_bounds = array<i64: 1, 32>}, {transform_indices = @transform_5, window_bounds = array<i64: 1, 8, 32>}, {transform_indices = @transform_6, window_bounds = array<i64: 1, 1, 8, 8>}]} {
    %c0_i32 = arith.constant 0 : i32
    %0 = arith.cmpi eq, %arg2, %c0_i32 : i32
    %1 = arith.extui %0 : i1 to i32
    %c0_i32_0 = arith.constant 0 : i32
    %2 = arith.cmpi ne, %1, %c0_i32_0 : i32
    scf.if %2 {
      %34 = arith.index_cast %arg1 : i32 to index
      %c0_17 = arith.constant 0 : index
      %c0_18 = arith.constant 0 : index
      %35 = vector.load %arg4[%34, %c0_17, %c0_18] : memref<4x32x24xf32, #tpu.memory_space<vmem>>, vector<1x32x24xf32>
      %36 = vector.shape_cast %35 : vector<1x32x24xf32> to vector<32x24xf32>
      %37 = arith.index_cast %arg1 : i32 to index
      %c0_19 = arith.constant 0 : index
      %c0_20 = arith.constant 0 : index
      %38 = vector.load %arg5[%37, %c0_19, %c0_20] : memref<4x1x24xf32, #tpu.memory_space<vmem>>, vector<1x1x24xf32>
      %39 = vector.shape_cast %38 : vector<1x1x24xf32> to vector<1x24xf32>
      %c0_21 = arith.constant 0 : index
      %c0_22 = arith.constant 0 : index
      %c0_23 = arith.constant 0 : index
      %40 = vector.load %arg3[%c0_21, %c0_22, %c0_23] : memref<1x8x32xf32, #tpu.memory_space<vmem>>, vector<1x8x32xf32>
      %41 = vector.shape_cast %40 : vector<1x8x32xf32> to vector<8x32xf32>
      %cst_24 = arith.constant dense<0.000000e+00> : vector<8x24xf32>
      %42 = tpu.matmul %41, %36, %cst_24 {dimension_numbers = #tpu.dot_dimension_numbers<[1], [0], [0], [1], [0, 0, 1, 1], [], []>} : vector<8x32xf32>, vector<32x24xf32>, vector<8x24xf32> -> vector<8x24xf32>
      %43 = vector.broadcast %39 : vector<1x24xf32> to vector<8x24xf32>
      %44 = arith.addf %42, %43 : vector<8x24xf32>
      %c0_25 = arith.constant 0 : index
      %c0_26 = arith.constant 0 : index
      %45 = vector.load %arg10[%c0_25, %c0_26] : memref<8x24xf32, #tpu.memory_space<vmem>>, vector<8x24xf32>
      tpu.vector_store %arg10[%c0_25, %c0_26], %44 {strides = array<i32>} : memref<8x24xf32, #tpu.memory_space<vmem>>, vector<8x24xf32>,
    } else {
    }
    %c8_i32 = arith.constant 8 : i32
    %3 = arith.muli %arg2, %c8_i32 : i32
    %4 = tpu.assume_multiple %3, 8 : i32
    %5 = arith.index_cast %4 : i32 to index
    %c0 = arith.constant 0 : index
    %6 = vector.load %arg10[%5, %c0] : memref<8x24xf32, #tpu.memory_space<vmem>>, vector<8x8xf32>
    %c0_1 = arith.constant 0 : index
    %c8 = arith.constant 8 : index
    %7 = vector.load %arg10[%c0_1, %c8] : memref<8x24xf32, #tpu.memory_space<vmem>>, vector<8x8xf32>
    %c0_2 = arith.constant 0 : index
    %c16 = arith.constant 16 : index
    %8 = vector.load %arg10[%c0_2, %c16] : memref<8x24xf32, #tpu.memory_space<vmem>>, vector<8x8xf32>
    "tpu.trace_start"() <{level = 10 : i32, message = "qd,kd->qk"}> : () -> ()
    %cst = arith.constant dense<0.000000e+00> : vector<8x8xf32>
    %9 = tpu.matmul %6, %7, %cst {dimension_numbers = #tpu.dot_dimension_numbers<[1], [1], [0], [0], [0, 0, 1, 0], [], []>} : vector<8x8xf32>, vector<8x8xf32>, vector<8x8xf32> -> vector<8x8xf32>
    "tpu.trace_stop"() : () -> ()
    %cst_3 = arith.constant dense<0xFF800000> : vector<8xf32>
    %10 = vector.multi_reduction <maximumf>, %9, %cst_3 [1] : vector<8x8xf32> to vector<8xf32>
    %11 = vector.shape_cast %10 : vector<8xf32> to vector<8x1xf32>
    %12 = vector.broadcast %11 : vector<8x1xf32> to vector<8x8xf32>
    %13 = arith.subf %9, %12 : vector<8x8xf32>
    %14 = math.exp %13 : vector<8x8xf32>
    %cst_4 = arith.constant dense<0.000000e+00> : vector<8xf32>
    %15 = vector.multi_reduction <add>, %14, %cst_4 [1] : vector<8x8xf32> to vector<8xf32>
    %16 = vector.shape_cast %15 : vector<8xf32> to vector<8x1xf32>
    %17 = tpu.reciprocal %16 : vector<8x1xf32> -> vector<8x1xf32>
    %18 = vector.broadcast %17 : vector<8x1xf32> to vector<8x8xf32>
    %19 = arith.mulf %14, %18 : vector<8x8xf32>
    %c0_5 = arith.constant 0 : index
    %c0_6 = arith.constant 0 : index
    %c0_7 = arith.constant 0 : index
    %c0_8 = arith.constant 0 : index
    %20 = vector.load %arg9[%c0_5, %c0_6, %c0_7, %c0_8] : memref<1x1x8x8xf32, #tpu.memory_space<vmem>>, vector<1x1x8x8xf32>
    %21 = vector.shape_cast %20 : vector<1x1x8x8xf32> to vector<8x8xf32>
    %22 = vector.shape_cast %19 : vector<8x8xf32> to vector<1x1x8x8xf32>
    tpu.vector_store %arg9[%c0_5, %c0_6, %c0_7, %c0_8], %22 {strides = array<i32>} : memref<1x1x8x8xf32, #tpu.memory_space<vmem>>, vector<1x1x8x8xf32>,
    %cst_9 = arith.constant dense<0.000000e+00> : vector<8x8xf32>
    %23 = tpu.matmul %19, %8, %cst_9 {dimension_numbers = #tpu.dot_dimension_numbers<[1], [0], [0], [1], [0, 0, 1, 1], [], []>} : vector<8x8xf32>, vector<8x8xf32>, vector<8x8xf32> -> vector<8x8xf32>
    %24 = arith.index_cast %arg1 : i32 to index
    %c0_10 = arith.constant 0 : index
    %c0_11 = arith.constant 0 : index
    %25 = vector.load %arg6[%24, %c0_10, %c0_11] : memref<4x8x32xf32, #tpu.memory_space<vmem>>, vector<1x8x32xf32>
    %26 = vector.shape_cast %25 : vector<1x8x32xf32> to vector<8x32xf32>
    %cst_12 = arith.constant dense<0.000000e+00> : vector<8x32xf32>
    %27 = tpu.matmul %23, %26, %cst_12 {dimension_numbers = #tpu.dot_dimension_numbers<[1], [0], [0], [1], [0, 0, 1, 1], [], []>} : vector<8x8xf32>, vector<8x32xf32>, vector<8x32xf32> -> vector<8x32xf32>
    %c0_i32_13 = arith.constant 0 : i32
    %28 = arith.cmpi eq, %arg1, %c0_i32_13 : i32
    %29 = arith.extui %28 : i1 to i32
    %c0_i32_14 = arith.constant 0 : i32
    %30 = arith.cmpi ne, %29, %c0_i32_14 : i32
    scf.if %30 {
      %c0_17 = arith.constant 0 : index
      %c0_18 = arith.constant 0 : index
      %34 = vector.load %arg7[%c0_17, %c0_18] : memref<1x32xf32, #tpu.memory_space<vmem>>, vector<1x32xf32>
      %35 = vector.broadcast %34 : vector<1x32xf32> to vector<8x32xf32>
      %36 = arith.addf %27, %35 : vector<8x32xf32>
      %c0_19 = arith.constant 0 : index
      %37 = arith.index_cast %4 : i32 to index
      %c0_20 = arith.constant 0 : index
      %38 = vector.load %arg8[%c0_19, %37, %c0_20] : memref<1x8x32xf32, #tpu.memory_space<vmem>>, vector<1x8x32xf32>
      %39 = vector.shape_cast %38 : vector<1x8x32xf32> to vector<8x32xf32>
      %40 = vector.shape_cast %36 : vector<8x32xf32> to vector<1x8x32xf32>
      tpu.vector_store %arg8[%c0_19, %37, %c0_20], %40 {strides = array<i32>} : memref<1x8x32xf32, #tpu.memory_space<vmem>>, vector<1x8x32xf32>,
    } else {
    }
    %c0_i32_15 = arith.constant 0 : i32
    %31 = arith.cmpi ne, %arg1, %c0_i32_15 : i32
    %32 = arith.extui %31 : i1 to i32
    %c0_i32_16 = arith.constant 0 : i32
    %33 = arith.cmpi ne, %32, %c0_i32_16 : i32
    scf.if %33 {
      %c0_17 = arith.constant 0 : index
      %34 = arith.index_cast %4 : i32 to index
      %c0_18 = arith.constant 0 : index
      %35 = vector.load %arg8[%c0_17, %34, %c0_18] : memref<1x8x32xf32, #tpu.memory_space<vmem>>, vector<1x8x32xf32>
      %36 = vector.shape_cast %35 : vector<1x8x32xf32> to vector<8x32xf32>
      %37 = arith.addf %36, %27 : vector<8x32xf32>
      %c0_19 = arith.constant 0 : index
      %38 = arith.index_cast %4 : i32 to index
      %c0_20 = arith.constant 0 : index
      %39 = vector.load %arg8[%c0_19, %38, %c0_20] : memref<1x8x32xf32, #tpu.memory_space<vmem>>, vector<1x8x32xf32>
      %40 = vector.shape_cast %39 : vector<1x8x32xf32> to vector<8x32xf32>
      %41 = vector.shape_cast %37 : vector<8x32xf32> to vector<1x8x32xf32>
      tpu.vector_store %arg8[%c0_19, %38, %c0_20], %41 {strides = array<i32>} : memref<1x8x32xf32, #tpu.memory_space<vmem>>, vector<1x8x32xf32>,
    } else {
    }
    return
  }
  func.func @transform_0(%arg0: i32, %arg1: i32, %arg2: i32) -> (i32, i32, i32) {
    %c0_i32 = arith.constant 0 : i32
    %c0_i32_0 = arith.constant 0 : i32
    %c0_i32_1 = arith.constant 0 : i32
    return %arg0, %c0_i32, %c0_i32_0 : i32, i32, i32
  }
  func.func @transform_1(%arg0: i32, %arg1: i32, %arg2: i32) -> (i32, i32, i32) {
    %c0_i32 = arith.constant 0 : i32
    %c0_i32_0 = arith.constant 0 : i32
    %c0_i32_1 = arith.constant 0 : i32
    %c0_i32_2 = arith.constant 0 : i32
    return %c0_i32, %c0_i32_0, %c0_i32_1 : i32, i32, i32
  }
  func.func @transform_2(%arg0: i32, %arg1: i32, %arg2: i32) -> (i32, i32, i32) {
    %c0_i32 = arith.constant 0 : i32
    %c0_i32_0 = arith.constant 0 : i32
    %c0_i32_1 = arith.constant 0 : i32
    %c0_i32_2 = arith.constant 0 : i32
    return %c0_i32, %c0_i32_0, %c0_i32_1 : i32, i32, i32
  }
  func.func @transform_3(%arg0: i32, %arg1: i32, %arg2: i32) -> (i32, i32, i32) {
    %c0_i32 = arith.constant 0 : i32
    %c0_i32_0 = arith.constant 0 : i32
    %c0_i32_1 = arith.constant 0 : i32
    %c0_i32_2 = arith.constant 0 : i32
    return %c0_i32, %c0_i32_0, %c0_i32_1 : i32, i32, i32
  }
  func.func @transform_4(%arg0: i32, %arg1: i32, %arg2: i32) -> (i32, i32) {
    %c0_i32 = arith.constant 0 : i32
    %c0_i32_0 = arith.constant 0 : i32
    %c0_i32_1 = arith.constant 0 : i32
    return %c0_i32, %c0_i32_0 : i32, i32
  }
  func.func @transform_5(%arg0: i32, %arg1: i32, %arg2: i32) -> (i32, i32, i32) {
    %c0_i32 = arith.constant 0 : i32
    %c0_i32_0 = arith.constant 0 : i32
    %c0_i32_1 = arith.constant 0 : i32
    return %arg0, %c0_i32, %c0_i32_0 : i32, i32, i32
  }
  func.func @transform_6(%arg0: i32, %arg1: i32, %arg2: i32) -> (i32, i32, i32, i32) {
    %c0_i32 = arith.constant 0 : i32
    %c0_i32_0 = arith.constant 0 : i32
    return %arg0, %arg1, %arg2, %c0_i32 : i32, i32, i32, i32
  }
}

module attributes {stable_mosaic.version = 11 : i64} {
  func.func @_mha_kernel(%arg0: i32, %arg1: i32, %arg2: i32, %arg3: memref<1x8x32xf32, #tpu.memory_space<vmem>>, %arg4: memref<4x32x24xf32, #tpu.memory_space<vmem>>, %arg5: memref<4x1x24xf32, #tpu.memory_space<vmem>>, %arg6: memref<4x8x32xf32, #tpu.memory_space<vmem>>, %arg7: memref<1x32xf32, #tpu.memory_space<vmem>>, %arg8: memref<1x8x32xf32, #tpu.memory_space<vmem>>, %arg9: memref<1x1x8x8xf32, #tpu.memory_space<vmem>>, %arg10: memref<8x24xf32, #tpu.memory_space<vmem>>) attributes {dimension_semantics = [#tpu.dimension_semantics<parallel>, #tpu.dimension_semantics<arbitrary>, #tpu.dimension_semantics<arbitrary>], iteration_bounds = array<i64: 2, 4, 1>, scalar_prefetch = 0 : i64, scratch_operands = 1 : i64, tpu.core_type = #tpu.core_type<tc>, window_params = [{transform_indices = @transform_0, window_bounds = array<i64: 1, 8, 32>}, {pipeline_mode = #tpu.pipeline_mode<synchronous>, transform_indices = @transform_1, window_bounds = array<i64: 4, 32, 24>}, {pipeline_mode = #tpu.pipeline_mode<synchronous>, transform_indices = @transform_2, window_bounds = array<i64: 4, 1, 24>}, {pipeline_mode = #tpu.pipeline_mode<synchronous>, transform_indices = @transform_3, window_bounds = array<i64: 4, 8, 32>}, {pipeline_mode = #tpu.pipeline_mode<synchronous>, transform_indices = @transform_4, window_bounds = array<i64: 1, 32>}, {transform_indices = @transform_5, window_bounds = array<i64: 1, 8, 32>}, {transform_indices = @transform_6, window_bounds = array<i64: 1, 1, 8, 8>}]} {
    %c0_i32 = arith.constant 0 : i32
    %0 = arith.cmpi eq, %arg2, %c0_i32 : i32
    %1 = arith.extui %0 : i1 to i32
    %c0_i32_0 = arith.constant 0 : i32
    %2 = arith.cmpi ne, %1, %c0_i32_0 : i32
    scf.if %2 {
      %34 = arith.index_cast %arg1 : i32 to index
      %c0_17 = arith.constant 0 : index
      %c0_18 = arith.constant 0 : index
      %35 = vector.load %arg4[%34, %c0_17, %c0_18] : memref<4x32x24xf32, #tpu.memory_space<vmem>>, vector<1x32x24xf32>
      %36 = vector.shape_cast %35 : vector<1x32x24xf32> to vector<32x24xf32>
      %37 = arith.index_cast %arg1 : i32 to index
      %c0_19 = arith.constant 0 : index
      %c0_20 = arith.constant 0 : index
      %38 = vector.load %arg5[%37, %c0_19, %c0_20] : memref<4x1x24xf32, #tpu.memory_space<vmem>>, vector<1x1x24xf32>
      %39 = vector.shape_cast %38 : vector<1x1x24xf32> to vector<1x24xf32>
      %c0_21 = arith.constant 0 : index
      %c0_22 = arith.constant 0 : index
      %c0_23 = arith.constant 0 : index
      %40 = vector.load %arg3[%c0_21, %c0_22, %c0_23] : memref<1x8x32xf32, #tpu.memory_space<vmem>>, vector<1x8x32xf32>
      %41 = vector.shape_cast %40 : vector<1x8x32xf32> to vector<8x32xf32>
      %cst_24 = arith.constant dense<0.000000e+00> : vector<8x24xf32>
      %42 = tpu.matmul %41, %36, %cst_24 {dimension_numbers = #tpu.dot_dimension_numbers<[1], [0], [0], [1], [0, 0, 1, 1], [], []>} : vector<8x32xf32>, vector<32x24xf32>, vector<8x24xf32> -> vector<8x24xf32>
      %43 = vector.broadcast %39 : vector<1x24xf32> to vector<8x24xf32>
      %44 = arith.addf %42, %43 : vector<8x24xf32>
      %c0_25 = arith.constant 0 : index
      %c0_26 = arith.constant 0 : index
      %45 = vector.load %arg10[%c0_25, %c0_26] : memref<8x24xf32, #tpu.memory_space<vmem>>, vector<8x24xf32>
      tpu.vector_store %arg10[%c0_25, %c0_26], %44 {strides = array<i32>} : memref<8x24xf32, #tpu.memory_space<vmem>>, vector<8x24xf32>,
    } else {
    }
    %c8_i32 = arith.constant 8 : i32
    %3 = arith.muli %arg2, %c8_i32 : i32
    %4 = tpu.assume_multiple %3, 8 : i32
    %5 = arith.index_cast %4 : i32 to index
    %c0 = arith.constant 0 : index
    %6 = vector.load %arg10[%5, %c0] : memref<8x24xf32, #tpu.memory_space<vmem>>, vector<8x8xf32>
    %c0_1 = arith.constant 0 : index
    %c8 = arith.constant 8 : index
    %7 = vector.load %arg10[%c0_1, %c8] : memref<8x24xf32, #tpu.memory_space<vmem>>, vector<8x8xf32>
    %c0_2 = arith.constant 0 : index
    %c16 = arith.constant 16 : index
    %8 = vector.load %arg10[%c0_2, %c16] : memref<8x24xf32, #tpu.memory_space<vmem>>, vector<8x8xf32>
    "tpu.trace_start"() <{level = 10 : i32, message = "qd,kd->qk"}> : () -> ()
    %cst = arith.constant dense<0.000000e+00> : vector<8x8xf32>
    %9 = tpu.matmul %6, %7, %cst {dimension_numbers = #tpu.dot_dimension_numbers<[1], [1], [0], [0], [0, 0, 1, 0], [], []>} : vector<8x8xf32>, vector<8x8xf32>, vector<8x8xf32> -> vector<8x8xf32>
    "tpu.trace_stop"() : () -> ()
    %cst_3 = arith.constant dense<0xFF800000> : vector<8xf32>
    %10 = vector.multi_reduction <maximumf>, %9, %cst_3 [1] : vector<8x8xf32> to vector<8xf32>
    %11 = vector.shape_cast %10 : vector<8xf32> to vector<8x1xf32>
    %12 = vector.broadcast %11 : vector<8x1xf32> to vector<8x8xf32>
    %13 = arith.subf %9, %12 : vector<8x8xf32>
    %14 = math.exp %13 : vector<8x8xf32>
    %cst_4 = arith.constant dense<0.000000e+00> : vector<8xf32>
    %15 = vector.multi_reduction <add>, %14, %cst_4 [1] : vector<8x8xf32> to vector<8xf32>
    %16 = vector.shape_cast %15 : vector<8xf32> to vector<8x1xf32>
    %17 = tpu.reciprocal %16 : vector<8x1xf32> -> vector<8x1xf32>
    %18 = vector.broadcast %17 : vector<8x1xf32> to vector<8x8xf32>
    %19 = arith.mulf %14, %18 : vector<8x8xf32>
    %c0_5 = arith.constant 0 : index
    %c0_6 = arith.constant 0 : index
    %c0_7 = arith.constant 0 : index
    %c0_8 = arith.constant 0 : index
    %20 = vector.load %arg9[%c0_5, %c0_6, %c0_7, %c0_8] : memref<1x1x8x8xf32, #tpu.memory_space<vmem>>, vector<1x1x8x8xf32>
    %21 = vector.shape_cast %20 : vector<1x1x8x8xf32> to vector<8x8xf32>
    %22 = vector.shape_cast %19 : vector<8x8xf32> to vector<1x1x8x8xf32>
    tpu.vector_store %arg9[%c0_5, %c0_6, %c0_7, %c0_8], %22 {strides = array<i32>} : memref<1x1x8x8xf32, #tpu.memory_space<vmem>>, vector<1x1x8x8xf32>,
    %cst_9 = arith.constant dense<0.000000e+00> : vector<8x8xf32>
    %23 = tpu.matmul %19, %8, %cst_9 {dimension_numbers = #tpu.dot_dimension_numbers<[1], [0], [0], [1], [0, 0, 1, 1], [], []>} : vector<8x8xf32>, vector<8x8xf32>, vector<8x8xf32> -> vector<8x8xf32>
    %24 = arith.index_cast %arg1 : i32 to index
    %c0_10 = arith.constant 0 : index
    %c0_11 = arith.constant 0 : index
    %25 = vector.load %arg6[%24, %c0_10, %c0_11] : memref<4x8x32xf32, #tpu.memory_space<vmem>>, vector<1x8x32xf32>
    %26 = vector.shape_cast %25 : vector<1x8x32xf32> to vector<8x32xf32>
    %cst_12 = arith.constant dense<0.000000e+00> : vector<8x32xf32>
    %27 = tpu.matmul %23, %26, %cst_12 {dimension_numbers = #tpu.dot_dimension_numbers<[1], [0], [0], [1], [0, 0, 1, 1], [], []>} : vector<8x8xf32>, vector<8x32xf32>, vector<8x32xf32> -> vector<8x32xf32>
    %c0_i32_13 = arith.constant 0 : i32
    %28 = arith.cmpi eq, %arg1, %c0_i32_13 : i32
    %29 = arith.extui %28 : i1 to i32
    %c0_i32_14 = arith.constant 0 : i32
    %30 = arith.cmpi ne, %29, %c0_i32_14 : i32
    scf.if %30 {
      %c0_17 = arith.constant 0 : index
      %c0_18 = arith.constant 0 : index
      %34 = vector.load %arg7[%c0_17, %c0_18] : memref<1x32xf32, #tpu.memory_space<vmem>>, vector<1x32xf32>
      %35 = vector.broadcast %34 : vector<1x32xf32> to vector<8x32xf32>
      %36 = arith.addf %27, %35 : vector<8x32xf32>
      %c0_19 = arith.constant 0 : index
      %37 = arith.index_cast %4 : i32 to index
      %c0_20 = arith.constant 0 : index
      %38 = vector.load %arg8[%c0_19, %37, %c0_20] : memref<1x8x32xf32, #tpu.memory_space<vmem>>, vector<1x8x32xf32>
      %39 = vector.shape_cast %38 : vector<1x8x32xf32> to vector<8x32xf32>
      %40 = vector.shape_cast %36 : vector<8x32xf32> to vector<1x8x32xf32>
      tpu.vector_store %arg8[%c0_19, %37, %c0_20], %40 {strides = array<i32>} : memref<1x8x32xf32, #tpu.memory_space<vmem>>, vector<1x8x32xf32>,
    } else {
    }
    %c0_i32_15 = arith.constant 0 : i32
    %31 = arith.cmpi ne, %arg1, %c0_i32_15 : i32
    %32 = arith.extui %31 : i1 to i32
    %c0_i32_16 = arith.constant 0 : i32
    %33 = arith.cmpi ne, %32, %c0_i32_16 : i32
    scf.if %33 {
      %c0_17 = arith.constant 0 : index
      %34 = arith.index_cast %4 : i32 to index
      %c0_18 = arith.constant 0 : index
      %35 = vector.load %arg8[%c0_17, %34, %c0_18] : memref<1x8x32xf32, #tpu.memory_space<vmem>>, vector<1x8x32xf32>
      %36 = vector.shape_cast %35 : vector<1x8x32xf32> to vector<8x32xf32>
      %37 = arith.addf %36, %27 : vector<8x32xf32>
      %c0_19 = arith.constant 0 : index
      %38 = arith.index_cast %4 : i32 to index
      %c0_20 = arith.constant 0 : index
      %39 = vector.load %arg8[%c0_19, %38, %c0_20] : memref<1x8x32xf32, #tpu.memory_space<vmem>>, vector<1x8x32xf32>
      %40 = vector.shape_cast %39 : vector<1x8x32xf32> to vector<8x32xf32>
      %41 = vector.shape_cast %37 : vector<8x32xf32> to vector<1x8x32xf32>
      tpu.vector_store %arg8[%c0_19, %38, %c0_20], %41 {strides = array<i32>} : memref<1x8x32xf32, #tpu.memory_space<vmem>>, vector<1x8x32xf32>,
    } else {
    }
    return
  }
  func.func @transform_0(%arg0: i32, %arg1: i32, %arg2: i32) -> (i32, i32, i32) {
    %c0_i32 = arith.constant 0 : i32
    %c0_i32_0 = arith.constant 0 : i32
    %c0_i32_1 = arith.constant 0 : i32
    return %arg0, %c0_i32, %c0_i32_0 : i32, i32, i32
  }
  func.func @transform_1(%arg0: i32, %arg1: i32, %arg2: i32) -> (i32, i32, i32) {
    %c0_i32 = arith.constant 0 : i32
    %c0_i32_0 = arith.constant 0 : i32
    %c0_i32_1 = arith.constant 0 : i32
    %c0_i32_2 = arith.constant 0 : i32
    return %c0_i32, %c0_i32_0, %c0_i32_1 : i32, i32, i32
  }
  func.func @transform_2(%arg0: i32, %arg1: i32, %arg2: i32) -> (i32, i32, i32) {
    %c0_i32 = arith.constant 0 : i32
    %c0_i32_0 = arith.constant 0 : i32
    %c0_i32_1 = arith.constant 0 : i32
    %c0_i32_2 = arith.constant 0 : i32
    return %c0_i32, %c0_i32_0, %c0_i32_1 : i32, i32, i32
  }
  func.func @transform_3(%arg0: i32, %arg1: i32, %arg2: i32) -> (i32, i32, i32) {
    %c0_i32 = arith.constant 0 : i32
    %c0_i32_0 = arith.constant 0 : i32
    %c0_i32_1 = arith.constant 0 : i32
    %c0_i32_2 = arith.constant 0 : i32
    return %c0_i32, %c0_i32_0, %c0_i32_1 : i32, i32, i32
  }
  func.func @transform_4(%arg0: i32, %arg1: i32, %arg2: i32) -> (i32, i32) {
    %c0_i32 = arith.constant 0 : i32
    %c0_i32_0 = arith.constant 0 : i32
    %c0_i32_1 = arith.constant 0 : i32
    return %c0_i32, %c0_i32_0 : i32, i32
  }
  func.func @transform_5(%arg0: i32, %arg1: i32, %arg2: i32) -> (i32, i32, i32) {
    %c0_i32 = arith.constant 0 : i32
    %c0_i32_0 = arith.constant 0 : i32
    %c0_i32_1 = arith.constant 0 : i32
    return %arg0, %c0_i32, %c0_i32_0 : i32, i32, i32
  }
  func.func @transform_6(%arg0: i32, %arg1: i32, %arg2: i32) -> (i32, i32, i32, i32) {
    %c0_i32 = arith.constant 0 : i32
    %c0_i32_0 = arith.constant 0 : i32
    return %arg0, %arg1, %arg2, %c0_i32 : i32, i32, i32, i32
  }
}

</mosaic_0001>

<llo_original>
// kernel: tpu_custom_call.1
$region0: #{tpu_custom_call.1}
  #allocation0 [shape = 'u32[]', space=smem, size = 0x4, offset = 0x4, fixed_abs, tag = 'smem constant byte address 0x4 - core index']
  #allocation1 [shape = 'u32[144,128]{1,0:T(1,128)}', space=vmem, size = 0x12000, scoped, tag = 'internal scratch']
  #allocation2 [shape = 'f32[8,24]{1,0:T(8,128)}', space=vmem, size = 0x1000, scoped, tag = 'scratch operand']
  %s0 = inlined_call_operand.vmem [shape: f32[2,8,32], index: 0, kind: input, shape index: {}]
  %s1 = inlined_call_operand.vmem [shape: f32[4,32,24], index: 1, kind: input, shape index: {}]
  %s2 = inlined_call_operand.vmem [shape: f32[4,1,24], index: 2, kind: input, shape index: {}]
  %s3 = inlined_call_operand.vmem [shape: f32[4,8,32], index: 3, kind: input, shape index: {}]
  %s4 = inlined_call_operand.vmem [shape: f32[1,32], index: 4, kind: input, shape index: {}]
  %s5 = inlined_call_operand.hbm [shape: f32[2,8,32], index: 5, kind: output, shape index: {0}]
  %s6 = inlined_call_operand.hbm [shape: f32[2,4,8,8], index: 6, kind: output, shape index: {1}]
  %7 = xla_tuple %s5, %s6
  %s8 = sld [smem:[#allocation0]]
  $region73: #{tpu_custom_call.1} parent=0
    _
  %s10 = ssub.s32 1, %s8
  %s11 = scalar_select 0, %s10, %s8
  $region1: #{tpu_custom_call.1} parent=0
    #allocation3 [shape = 'u8[8192]{0}', space=vmem, size = 0x2000, scoped, tag = 'output window, operand 0']
    #allocation4 [shape = 's32[2]{0}', space=sflag, size = 0x8, scoped, tag = 'scoped memory for tpu_custom_call.1']
    #allocation5 [shape = 'u8[8192]{0}', space=vmem, size = 0x2000, scoped, tag = 'output window, operand 1']
    #allocation6 [shape = 's32[2]{0}', space=sflag, size = 0x8, scoped, tag = 'scoped memory for tpu_custom_call.1']
    %12 = vsyncpa [#allocation4], 0
    %s13 = scalar_lea.sflag [#allocation4], 1
    %14 = vsyncpa %s13, 0
    %15 = vsyncpa [#allocation6], 0
    %s16 = scalar_lea.sflag [#allocation6], 1
    %17 = vsyncpa %s16, 0
    loop: start=0, step=1, limit=10
    $region2: #{tpu_custom_call.1} parent=1 // loop_pre_header
      _
    $region3: #{tpu_custom_call.1} parent=1 // loop_header
      %s19 = sphi 0, %s23
      %p20 = scmp.ge.s32.totalorder %s19, 10
      %s26 = sphi 0, %s45
      %s27 = sphi 0, %s41
      %s28 = sphi 0, %s37
      %s29 = sphi 0, %s26
      %s30 = sphi 0, %s27
      %s31 = sphi 0, %s28
      %s32 = sphi 0, %s29
      %s33 = sphi 0, %s30
      %s34 = sphi 0, %s31
      %s48 = sphi 0, %s50
      %s51 = sphi 0, %s48
      %s52 = sphi 0, %s51
      %s68 = sphi 0, %s52
      %s72 = sphi 0, %s72
      %s74 = sphi 0, %s72
      %s75 = sphi 0, %s74
      %s89 = sphi 0, %s75
      %s93 = sphi 0, %s93
      %s95 = sphi 0, %s93
      %s96 = sphi 0, %s95
      %s110 = sphi 0, %s96
      %s114 = sphi 0, %s114
      %s116 = sphi 0, %s114
      %s117 = sphi 0, %s116
      %s131 = sphi 0, %s117
      %s135 = sphi 0, %s135
      %s137 = sphi 0, %s135
      %s138 = sphi 0, %s137
      %s152 = sphi 0, %s138
      %s158 = sphi 0, %s160
      %s161 = sphi 0, %s158
      %s162 = sphi 0, %s161
      %s178 = sphi 0, %s162
      %s188 = sphi 0, %s190
      %s191 = sphi 0, %s188
      %s192 = sphi 0, %s191
      %s208 = sphi 0, %s192
    $region4: #{tpu_custom_call.1} parent=1 // loop_header_branch
      %22 = sbr.rel (%p20) target = $region8
    $region5: #{tpu_custom_call.1} parent=1 // loop_body
      %s24 = ssub.s32 %s19, 1
      %s25 = ssub.s32 %s19, 2
      %s35 = sadd.s32 1, %s28
      %p36 = scmp.ge.s32.totalorder %s35, 1
      %s37 = scalar_select %p36, 0, %s35
      %s38 = sadd.s32 1, %s27
      %s39 = scalar_select %p36, %s38, %s27
      %p40 = scmp.ge.s32.totalorder %s39, 4
      %s41 = scalar_select %p40, 0, %s39
      %s42 = sadd.s32 1, %s26
      %s43 = scalar_select %p40, %s42, %s26
      %p44 = scmp.ge.s32.totalorder %s43, 2
      %s45 = scalar_select %p44, 0, %s43
      %s46 = ssub.s32 %s26, %s45
      %p47 = scmp.eq.s32.totalorder %s46, 0
      %s49 = sadd.s32 %s48, 1
      %s50 = scalar_select %p47, %s48, %s49
      %p53 = pneg %p47
      %p54 = scmp.eq.s32.totalorder %s19, 7
      %p55 = por %p53, %p54
      %p56 = scmp.ne.s32.totalorder %s48, %s51
      %p57 = scmp.eq.s32.totalorder %s19, 0
      %p58 = por %p56, %p57
      %p59 = scmp.ne.s32.totalorder %s48, %s51
      %p60 = scmp.eq.s32.totalorder %s24, 7
      %p61 = por %p59, %p60
      %p62 = scmp.ne.s32.totalorder %s51, %s52
      %p63 = scmp.eq.s32.totalorder %s24, 0
      %p64 = por %p62, %p63
      %p65 = scmp.ne.s32.totalorder %s51, %s52
      %p66 = scmp.eq.s32.totalorder %s25, 7
      %p67 = por %p65, %p66
      %p69 = scmp.ne.s32.totalorder %s52, %s68
      %p70 = scmp.eq.s32.totalorder %s25, 0
      %p71 = por %p69, %p70
      %s73 = sadd.s32 %s72, 1
      %p76 = scmp.eq.s32.totalorder %s19, 7
      %p77 = scmp.ne.s32.totalorder %s72, %s74
      %p78 = scmp.eq.s32.totalorder %s19, 0
      %p79 = por %p77, %p78
      %p80 = scmp.ne.s32.totalorder %s72, %s74
      %p81 = scmp.eq.s32.totalorder %s24, 7
      %p82 = por %p80, %p81
      %p83 = scmp.ne.s32.totalorder %s74, %s75
      %p84 = scmp.eq.s32.totalorder %s24, 0
      %p85 = por %p83, %p84
      %p86 = scmp.ne.s32.totalorder %s74, %s75
      %p87 = scmp.eq.s32.totalorder %s25, 7
      %p88 = por %p86, %p87
      %p90 = scmp.ne.s32.totalorder %s75, %s89
      %p91 = scmp.eq.s32.totalorder %s25, 0
      %p92 = por %p90, %p91
      %s94 = sadd.s32 %s93, 1
      %p97 = scmp.eq.s32.totalorder %s19, 7
      %p98 = scmp.ne.s32.totalorder %s93, %s95
      %p99 = scmp.eq.s32.totalorder %s19, 0
      %p100 = por %p98, %p99
      %p101 = scmp.ne.s32.totalorder %s93, %s95
      %p102 = scmp.eq.s32.totalorder %s24, 7
      %p103 = por %p101, %p102
      %p104 = scmp.ne.s32.totalorder %s95, %s96
      %p105 = scmp.eq.s32.totalorder %s24, 0
      %p106 = por %p104, %p105
      %p107 = scmp.ne.s32.totalorder %s95, %s96
      %p108 = scmp.eq.s32.totalorder %s25, 7
      %p109 = por %p107, %p108
      %p111 = scmp.ne.s32.totalorder %s96, %s110
      %p112 = scmp.eq.s32.totalorder %s25, 0
      %p113 = por %p111, %p112
      %s115 = sadd.s32 %s114, 1
      %p118 = scmp.eq.s32.totalorder %s19, 7
      %p119 = scmp.ne.s32.totalorder %s114, %s116
      %p120 = scmp.eq.s32.totalorder %s19, 0
      %p121 = por %p119, %p120
      %p122 = scmp.ne.s32.totalorder %s114, %s116
      %p123 = scmp.eq.s32.totalorder %s24, 7
      %p124 = por %p122, %p123
      %p125 = scmp.ne.s32.totalorder %s116, %s117
      %p126 = scmp.eq.s32.totalorder %s24, 0
      %p127 = por %p125, %p126
      %p128 = scmp.ne.s32.totalorder %s116, %s117
      %p129 = scmp.eq.s32.totalorder %s25, 7
      %p130 = por %p128, %p129
      %p132 = scmp.ne.s32.totalorder %s117, %s131
      %p133 = scmp.eq.s32.totalorder %s25, 0
      %p134 = por %p132, %p133
      %s136 = sadd.s32 %s135, 1
      %p139 = scmp.eq.s32.totalorder %s19, 7
      %p140 = scmp.ne.s32.totalorder %s135, %s137
      %p141 = scmp.eq.s32.totalorder %s19, 0
      %p142 = por %p140, %p141
      %p143 = scmp.ne.s32.totalorder %s135, %s137
      %p144 = scmp.eq.s32.totalorder %s24, 7
      %p145 = por %p143, %p144
      %p146 = scmp.ne.s32.totalorder %s137, %s138
      %p147 = scmp.eq.s32.totalorder %s24, 0
      %p148 = por %p146, %p147
      %p149 = scmp.ne.s32.totalorder %s137, %s138
      %p150 = scmp.eq.s32.totalorder %s25, 7
      %p151 = por %p149, %p150
      %p153 = scmp.ne.s32.totalorder %s138, %s152
      %p154 = scmp.eq.s32.totalorder %s25, 0
      %p155 = por %p153, %p154
      %s156 = ssub.s32 %s26, %s45
      %p157 = scmp.eq.s32.totalorder %s156, 0
      %s159 = sadd.s32 %s158, 1
      %s160 = scalar_select %p157, %s158, %s159
      %p163 = pneg %p157
      %p164 = scmp.eq.s32.totalorder %s19, 7
      %p165 = por %p163, %p164
      %p166 = scmp.ne.s32.totalorder %s158, %s161
      %p167 = scmp.eq.s32.totalorder %s19, 0
      %p168 = por %p166, %p167
      %p169 = scmp.ne.s32.totalorder %s158, %s161
      %p170 = scmp.eq.s32.totalorder %s24, 7
      %p171 = por %p169, %p170
      %p172 = scmp.ne.s32.totalorder %s161, %s162
      %p173 = scmp.eq.s32.totalorder %s24, 0
      %p174 = por %p172, %p173
      %p175 = scmp.ne.s32.totalorder %s161, %s162
      %p176 = scmp.eq.s32.totalorder %s25, 7
      %p177 = por %p175, %p176
      %p179 = scmp.ne.s32.totalorder %s162, %s178
      %p180 = scmp.eq.s32.totalorder %s25, 0
      %p181 = por %p179, %p180
      %s182 = ssub.s32 %s26, %s45
      %s183 = ssub.s32 %s27, %s41
      %s184 = sor.u32 %s182, %s183
      %s185 = ssub.s32 %s28, %s37
      %s186 = sor.u32 %s184, %s185
      %p187 = scmp.eq.s32.totalorder %s186, 0
      %s189 = sadd.s32 %s188, 1
      %s190 = scalar_select %p187, %s188, %s189
      %p193 = pneg %p187
      %p194 = scmp.eq.s32.totalorder %s19, 7
      %p195 = por %p193, %p194
      %p196 = scmp.ne.s32.totalorder %s188, %s191
      %p197 = scmp.eq.s32.totalorder %s19, 0
      %p198 = por %p196, %p197
      %p199 = scmp.ne.s32.totalorder %s188, %s191
      %p200 = scmp.eq.s32.totalorder %s24, 7
      %p201 = por %p199, %p200
      %p202 = scmp.ne.s32.totalorder %s191, %s192
      %p203 = scmp.eq.s32.totalorder %s24, 0
      %p204 = por %p202, %p203
      %p205 = scmp.ne.s32.totalorder %s191, %s192
      %p206 = scmp.eq.s32.totalorder %s25, 7
      %p207 = por %p205, %p206
      %p209 = scmp.ne.s32.totalorder %s192, %s208
      %p210 = scmp.eq.s32.totalorder %s25, 0
      %p211 = por %p209, %p210
      %p212 = scmp.le.s32.totalorder 1, %s19
      %p213 = scmp.lt.s32.totalorder %s19, 9
      %p214 = pnand %p212, %p213
      %p215 = pneg %p214
      // Predicated region
      $region9: #{tpu_custom_call.1} parent=5 // pred_check
        _
      $region10: #{tpu_custom_call.1} parent=5 // pred_check_branch
        %217 = sbr.rel (%p214) target = $region12
      $region11: #{tpu_custom_call.1} parent=5 // pred_region
        %s218 = ssub.s32 %s19, 1
        // Predicated region
        $region13: #{tpu_custom_call.1} parent=11 // pred_check
          %p219 = pneg %p85
        $region14: #{tpu_custom_call.1} parent=11 // pred_check_branch
          %221 = sbr.rel (%p219) target = $region16
        $region15: #{tpu_custom_call.1} parent=11 // pred_region
          _
        $region16: #{tpu_custom_call.1} parent=11 // pred_fallthru
          _
        // Predicated region
        $region17: #{tpu_custom_call.1} parent=11 // pred_check
          %p222 = pneg %p106
        $region18: #{tpu_custom_call.1} parent=11 // pred_check_branch
          %224 = sbr.rel (%p222) target = $region20
        $region19: #{tpu_custom_call.1} parent=11 // pred_region
          _
        $region20: #{tpu_custom_call.1} parent=11 // pred_fallthru
          _
        // Predicated region
        $region21: #{tpu_custom_call.1} parent=11 // pred_check
          %p225 = pneg %p127
        $region22: #{tpu_custom_call.1} parent=11 // pred_check_branch
          %227 = sbr.rel (%p225) target = $region24
        $region23: #{tpu_custom_call.1} parent=11 // pred_region
          _
        $region24: #{tpu_custom_call.1} parent=11 // pred_fallthru
          _
        // Predicated region
        $region25: #{tpu_custom_call.1} parent=11 // pred_check
          %p228 = pneg %p148
        $region26: #{tpu_custom_call.1} parent=11 // pred_check_branch
          %230 = sbr.rel (%p228) target = $region28
        $region27: #{tpu_custom_call.1} parent=11 // pred_region
          _
        $region28: #{tpu_custom_call.1} parent=11 // pred_fallthru
          _
      $region12: #{tpu_custom_call.1} parent=5 // pred_fallthru
        _
      %p231 = scmp.lt.s32.totalorder %s19, 8
      // Predicated region
      $region29: #{tpu_custom_call.1} parent=5 // pred_check
        %p232 = pneg %p231
      $region30: #{tpu_custom_call.1} parent=5 // pred_check_branch
        %234 = sbr.rel (%p232) target = $region32
      $region31: #{tpu_custom_call.1} parent=5 // pred_region
        // Predicated region
        $region33: #{tpu_custom_call.1} parent=31 // pred_check
          %p235 = pneg %p58
        $region34: #{tpu_custom_call.1} parent=31 // pred_check_branch
          %237 = sbr.rel (%p235) target = $region36
        $region35: #{tpu_custom_call.1} parent=31 // pred_region
          %p238 = scmp.lt.s32.totalorder %s26, 1
          %s239 = scalar_select %p238, %s26, 1
          %s240 = smul.addr %s239, 8
          %s241 = scalar_lea.vmem %s0, %s240
        $region36: #{tpu_custom_call.1} parent=31 // pred_fallthru
          _
      $region32: #{tpu_custom_call.1} parent=5 // pred_fallthru
        _
      %p242 = scmp.le.s32.totalorder 1, %s19
      %p243 = scmp.lt.s32.totalorder %s19, 9
      %p244 = pnand %p242, %p243
      %p245 = pneg %p244
      // Predicated region
      $region37: #{tpu_custom_call.1} parent=5 // pred_check
        _
      $region38: #{tpu_custom_call.1} parent=5 // pred_check_branch
        %247 = sbr.rel (%p244) target = $region40
      $region39: #{tpu_custom_call.1} parent=5 // pred_region
        %s248 = ssub.s32 %s19, 1
        %p249 = scmp.lt.s32.totalorder %s29, 1
        %s250 = scalar_select %p249, %s29, 1
        %s251 = smul.addr %s250, 8
        %s252 = scalar_lea.vmem %s0, %s251
        %p253 = pneg %p64
        %p254 = pneg %p61
        %p255 = pneg %p85
        %p256 = pneg %p82
        %p257 = pneg %p106
        %p258 = pneg %p103
        %p259 = pneg %p127
        %p260 = pneg %p124
        %p261 = pneg %p148
        %p262 = pneg %p145
        %p263 = pneg %p174
        %p264 = pneg %p171
        %s265 = sand.u32 %s161, 1
        %s266 = scalar_lea.sflag [#allocation4], %s265
        %s267 = sand.u32 %s161, 1
        %s268 = smul.addr %s267, 8
        %s269 = scalar_lea.vmem [#allocation3], %s268
        %p270 = pneg %p204
        %p271 = pneg %p201
        %s272 = sand.u32 %s191, 1
        %s273 = scalar_lea.sflag [#allocation6], %s272
        %s274 = sand.u32 %s191, 1
        %s275 = smul.addr %s274, 8
        %s276 = scalar_lea.vmem [#allocation5], %s275
        %p277 = scmp.lt.s32.totalorder %s29, 1
        %s278 = scalar_select %p277, %s29, 1
        %s279 = smul.addr %s278, 8
        %s280 = scalar_lea.vmem %s0, %s279
        %p281 = scmp.eq.s32.totalorder %s31, 0
        // Predicated region
        $region41: #{tpu_custom_call.1} parent=39 // pred_check
          %p282 = pneg %p281
        $region42: #{tpu_custom_call.1} parent=39 // pred_check_branch
          %284 = sbr.rel (%p282) target = $region44
        $region43: #{tpu_custom_call.1} parent=39 // pred_region
          %s285 = smul.u32 %s30, 32
          %s286 = scalar_lea.vmem %s1, %s285
          %v287 = vld [vmem:[%s286] sm:$0xff]
          %v288 = vld [vmem:[%s286 + $0x8] sm:$0xff]
          %v289 = vld [vmem:[%s286 + $0x10] sm:$0xff]
          %v290 = vld [vmem:[%s286 + $0x18] sm:$0xff]
          %s291 = scalar_lea.vmem %s2, %s30
          %v292 = vld [vmem:[%s291] sm:$0x1]
          %v293 = vld [vmem:[%s280] sm:$0xff]
          %v295 = vlaneseq
          %v296 = vshrl.u32 %v295, 7
          %v297 = vsub.s32 0, %v296
          %v298 = vrot.slane %v292, %v297
          %vm300 = vcmask 261120
          %v302 = vsel %vm300, %v293, 0
          %304 = vmatprep.subr.mxu0 0.0
          %305 = vmatpush1.msra.mxu0 0.0
          %306 = vmatprep.subr.mxu0 0.0
          %307 = vmatpush1.msra.mxu0 0.0
          %308 = vmatprep.subr.mxu0 0.0
          %309 = vmatpush1.msra.mxu0 0.0
          %310 = vmatprep.subr.mxu0 0.0
          %311 = vmatpush1.msra.mxu0 0.0
          %312 = vmatprep.subr.mxu0 0.0
          %313 = vmatpush1.msra.mxu0 0.0
          %314 = vmatprep.subr.mxu0 0.0
          %315 = vmatpush1.msra.mxu0 0.0
          %316 = vmatprep.subr.mxu0 0.0
          %317 = vmatpush1.msra.mxu0 0.0
          %318 = vmatprep.subr.mxu0 0.0
          %319 = vmatpush1.msra.mxu0 0.0
          %320 = vmatprep.subr.mxu0 0.0
          %321 = vmatpush1.msra.mxu0 0.0
          %322 = vmatprep.subr.mxu0 0.0
          %323 = vmatpush1.msra.mxu0 0.0
          %324 = vmatprep.subr.mxu0 0.0
          %325 = vmatpush1.msra.mxu0 0.0
          %326 = vmatprep.subr.mxu0 0.0
          %327 = vmatpush1.msra.mxu0 0.0
          %328 = vmatprep.subr.mxu0 0.0
          %329 = vmatpush1.msra.mxu0 %v290
          %330 = vmatprep.subr.mxu0 0.0
          %331 = vmatpush1.msra.mxu0 %v289
          %332 = vmatprep.subr.mxu0 0.0
          %333 = vmatpush1.msra.mxu0 %v288
          %334 = vmatprep.subr.mxu0 0.0
          %335 = vmatpush1.msra.mxu0 %v287
          %336 = vmatprep.subr.mxu0 0.0
          %337 = vmatpush2.msra.mxu0 0.0
          %338 = vmatprep.subr.mxu0 0.0
          %339 = vmatpush2.msra.mxu0 0.0
          %340 = vmatprep.subr.mxu0 0.0
          %341 = vmatpush2.msra.mxu0 0.0
          %342 = vmatprep.subr.mxu0 0.0
          %343 = vmatpush2.msra.mxu0 0.0
          %344 = vmatprep.subr.mxu0 0.0
          %345 = vmatpush2.msra.mxu0 0.0
          %346 = vmatprep.subr.mxu0 0.0
          %347 = vmatpush2.msra.mxu0 0.0
          %348 = vmatprep.subr.mxu0 0.0
          %349 = vmatpush2.msra.mxu0 0.0
          %350 = vmatprep.subr.mxu0 0.0
          %351 = vmatpush2.msra.mxu0 0.0
          %352 = vmatprep.subr.mxu0 0.0
          %353 = vmatpush2.msra.mxu0 0.0
          %354 = vmatprep.subr.mxu0 0.0
          %355 = vmatpush2.msra.mxu0 0.0
          %356 = vmatprep.subr.mxu0 0.0
          %357 = vmatpush2.msra.mxu0 0.0
          %358 = vmatprep.subr.mxu0 0.0
          %359 = vmatpush2.msra.mxu0 0.0
          %360 = vmatprep.subr.mxu0 0.0
          %361 = vmatpush2.msra.mxu0 0.0
          %362 = vmatprep.subr.mxu0 0.0
          %363 = vmatpush2.msra.mxu0 0.0
          %364 = vmatprep.subr.mxu0 0.0
          %365 = vmatpush2.msra.mxu0 0.0
          %366 = vmatprep.subr.mxu0 0.0
          %367 = vmatpush2.msra.mxu0 0.0
          %368 = vmatprep.mubr.f32.mxu0 0.0
          %369 = vmatmul.mubr.f32.gmra.mxu0 %v302
          %v370 = vpop.f32.mrf.mxu0
          %v371 = vadd.f32 %v298, %v370
          %v372 = vpop.f32.mrf.mxu0
          %373 = vdwg.mxu0
          %vm374 = vcmask 195584
          %375 = vst.msk [vmem:[#allocation2] sm:$0xff] %vm374, %v371
        $region44: #{tpu_custom_call.1} parent=39 // pred_fallthru
          _
        %s376 = smul.u32 %s31, 8
        %s377 = scalar_lea.vmem [#allocation2], %s376
        %v378 = vld [vmem:[%s377] sm:$0xff]
        %v379 = vld [vmem:[#allocation2] sm:$0xff]
        %381 = vrot.lane.b32.xlu0 %v379, 120
        %v382 = vpop.permute.xlu0 %381
        %vm383 = vcmask 64512
        %v385 = vsel %vm383, %v378, 0
        %v387 = vsel %vm383, %v382, 0
        %389 = vmatprep.subr.mxu0 0.0
        %390 = vmatpush1.xpose.msra.mxu0 0.0
        %391 = vmatprep.subr.mxu0 0.0
        %392 = vmatpush1.xpose.msra.mxu0 0.0
        %393 = vmatprep.subr.mxu0 0.0
        %394 = vmatpush1.xpose.msra.mxu0 0.0
        %395 = vmatprep.subr.mxu0 0.0
        %396 = vmatpush1.xpose.msra.mxu0 0.0
        %397 = vmatprep.subr.mxu0 0.0
        %398 = vmatpush1.xpose.msra.mxu0 0.0
        %399 = vmatprep.subr.mxu0 0.0
        %400 = vmatpush1.xpose.msra.mxu0 0.0
        %401 = vmatprep.subr.mxu0 0.0
        %402 = vmatpush1.xpose.msra.mxu0 0.0
        %403 = vmatprep.subr.mxu0 0.0
        %404 = vmatpush1.xpose.msra.mxu0 0.0
        %405 = vmatprep.subr.mxu0 0.0
        %406 = vmatpush1.xpose.msra.mxu0 0.0
        %407 = vmatprep.subr.mxu0 0.0
        %408 = vmatpush1.xpose.msra.mxu0 0.0
        %409 = vmatprep.subr.mxu0 0.0
        %410 = vmatpush1.xpose.msra.mxu0 0.0
        %411 = vmatprep.subr.mxu0 0.0
        %412 = vmatpush1.xpose.msra.mxu0 0.0
        %413 = vmatprep.subr.mxu0 0.0
        %414 = vmatpush1.xpose.msra.mxu0 0.0
        %415 = vmatprep.subr.mxu0 0.0
        %416 = vmatpush1.xpose.msra.mxu0 0.0
        %417 = vmatprep.subr.mxu0 0.0
        %418 = vmatpush1.xpose.msra.mxu0 0.0
        %419 = vmatprep.subr.mxu0 0.0
        %420 = vmatpush1.xpose.msra.mxu0 %v387
        %421 = vmatprep.subr.mxu0 0.0
        %422 = vmatpush2.xpose.msra.mxu0 0.0
        %423 = vmatprep.subr.mxu0 0.0
        %424 = vmatpush2.xpose.msra.mxu0 0.0
        %425 = vmatprep.subr.mxu0 0.0
        %426 = vmatpush2.xpose.msra.mxu0 0.0
        %427 = vmatprep.subr.mxu0 0.0
        %428 = vmatpush2.xpose.msra.mxu0 0.0
        %429 = vmatprep.subr.mxu0 0.0
        %430 = vmatpush2.xpose.msra.mxu0 0.0
        %431 = vmatprep.subr.mxu0 0.0
        %432 = vmatpush2.xpose.msra.mxu0 0.0
        %433 = vmatprep.subr.mxu0 0.0
        %434 = vmatpush2.xpose.msra.mxu0 0.0
        %435 = vmatprep.subr.mxu0 0.0
        %436 = vmatpush2.xpose.msra.mxu0 0.0
        %437 = vmatprep.subr.mxu0 0.0
        %438 = vmatpush2.xpose.msra.mxu0 0.0
        %439 = vmatprep.subr.mxu0 0.0
        %440 = vmatpush2.xpose.msra.mxu0 0.0
        %441 = vmatprep.subr.mxu0 0.0
        %442 = vmatpush2.xpose.msra.mxu0 0.0
        %443 = vmatprep.subr.mxu0 0.0
        %444 = vmatpush2.xpose.msra.mxu0 0.0
        %445 = vmatprep.subr.mxu0 0.0
        %446 = vmatpush2.xpose.msra.mxu0 0.0
        %447 = vmatprep.subr.mxu0 0.0
        %448 = vmatpush2.xpose.msra.mxu0 0.0
        %449 = vmatprep.subr.mxu0 0.0
        %450 = vmatpush2.xpose.msra.mxu0 0.0
        %451 = vmatprep.subr.mxu0 0.0
        %452 = vmatpush2.xpose.msra.mxu0 0.0
        %453 = vmatprep.mubr.f32.mxu0 0.0
        %454 = vmatmul.mubr.f32.gmra.mxu0 %v385
        %v455 = vpop.f32.mrf.mxu0
        %v456 = vadd.f32 0.0, %v455
        %v457 = vpop.f32.mrf.mxu0
        %458 = vdwg.mxu0
        %v459 = vsel %vm383, %v456, -inf
        %460 = vmax.xlane.f32.xlu0 %v459
        %v461 = vpop.xlane.xlu0 %460
        %v462 = vsub.f32 %v456, %v461
        %v463 = vmul.f32 %v462, 1.442695
        %v464 = vpow.pop %v463
        %v465 = vsel %vm383, %v464, 0.0
        %466 = vadd.xlane.f32.xlu0 %v465
        %v467 = vpop.xlane.xlu0 %466
        %v468 = vrcp.pop %v467
        %v469 = vmul.f32 %v464, %v468
        %470 = vst.msk [vmem:[%s276] sm:$0xff] %vm383, %v469
        %471 = vrot.lane.b32.xlu0 %v379, 112
        %v472 = vpop.permute.xlu0 %471
        %v475 = vsel %vm383, %v469, 0
        %477 = vmatprep.subr.mxu0 0.0
        %478 = vmatpush1.msra.mxu0 0.0
        %479 = vmatprep.subr.mxu0 0.0
        %480 = vmatpush1.msra.mxu0 0.0
        %481 = vmatprep.subr.mxu0 0.0
        %482 = vmatpush1.msra.mxu0 0.0
        %483 = vmatprep.subr.mxu0 0.0
        %484 = vmatpush1.msra.mxu0 0.0
        %485 = vmatprep.subr.mxu0 0.0
        %486 = vmatpush1.msra.mxu0 0.0
        %487 = vmatprep.subr.mxu0 0.0
        %488 = vmatpush1.msra.mxu0 0.0
        %489 = vmatprep.subr.mxu0 0.0
        %490 = vmatpush1.msra.mxu0 0.0
        %491 = vmatprep.subr.mxu0 0.0
        %492 = vmatpush1.msra.mxu0 0.0
        %493 = vmatprep.subr.mxu0 0.0
        %494 = vmatpush1.msra.mxu0 0.0
        %495 = vmatprep.subr.mxu0 0.0
        %496 = vmatpush1.msra.mxu0 0.0
        %497 = vmatprep.subr.mxu0 0.0
        %498 = vmatpush1.msra.mxu0 0.0
        %499 = vmatprep.subr.mxu0 0.0
        %500 = vmatpush1.msra.mxu0 0.0
        %501 = vmatprep.subr.mxu0 0.0
        %502 = vmatpush1.msra.mxu0 0.0
        %503 = vmatprep.subr.mxu0 0.0
        %504 = vmatpush1.msra.mxu0 0.0
        %505 = vmatprep.subr.mxu0 0.0
        %506 = vmatpush1.msra.mxu0 0.0
        %507 = vmatprep.subr.mxu0 0.0
        %508 = vmatpush1.msra.mxu0 %v472
        %509 = vmatprep.subr.mxu0 0.0
        %510 = vmatpush2.msra.mxu0 0.0
        %511 = vmatprep.subr.mxu0 0.0
        %512 = vmatpush2.msra.mxu0 0.0
        %513 = vmatprep.subr.mxu0 0.0
        %514 = vmatpush2.msra.mxu0 0.0
        %515 = vmatprep.subr.mxu0 0.0
        %516 = vmatpush2.msra.mxu0 0.0
        %517 = vmatprep.subr.mxu0 0.0
        %518 = vmatpush2.msra.mxu0 0.0
        %519 = vmatprep.subr.mxu0 0.0
        %520 = vmatpush2.msra.mxu0 0.0
        %521 = vmatprep.subr.mxu0 0.0
        %522 = vmatpush2.msra.mxu0 0.0
        %523 = vmatprep.subr.mxu0 0.0
        %524 = vmatpush2.msra.mxu0 0.0
        %525 = vmatprep.subr.mxu0 0.0
        %526 = vmatpush2.msra.mxu0 0.0
        %527 = vmatprep.subr.mxu0 0.0
        %528 = vmatpush2.msra.mxu0 0.0
        %529 = vmatprep.subr.mxu0 0.0
        %530 = vmatpush2.msra.mxu0 0.0
        %531 = vmatprep.subr.mxu0 0.0
        %532 = vmatpush2.msra.mxu0 0.0
        %533 = vmatprep.subr.mxu0 0.0
        %534 = vmatpush2.msra.mxu0 0.0
        %535 = vmatprep.subr.mxu0 0.0
        %536 = vmatpush2.msra.mxu0 0.0
        %537 = vmatprep.subr.mxu0 0.0
        %538 = vmatpush2.msra.mxu0 0.0
        %539 = vmatprep.subr.mxu0 0.0
        %540 = vmatpush2.msra.mxu0 0.0
        %541 = vmatprep.mubr.f32.mxu0 0.0
        %542 = vmatmul.mubr.f32.gmra.mxu0 %v475
        %v543 = vpop.f32.mrf.mxu0
        %v544 = vadd.f32 0.0, %v543
        %v545 = vpop.f32.mrf.mxu0
        %546 = vdwg.mxu0
        %s547 = smul.u32 %s30, 8
        %s548 = scalar_lea.vmem %s3, %s547
        %v549 = vld [vmem:[%s548] sm:$0xff]
        %v551 = vsel %vm383, %v544, 0
        %553 = vmatprep.subr.mxu0 0.0
        %554 = vmatpush1.msra.mxu0 0.0
        %555 = vmatprep.subr.mxu0 0.0
        %556 = vmatpush1.msra.mxu0 0.0
        %557 = vmatprep.subr.mxu0 0.0
        %558 = vmatpush1.msra.mxu0 0.0
        %559 = vmatprep.subr.mxu0 0.0
        %560 = vmatpush1.msra.mxu0 0.0
        %561 = vmatprep.subr.mxu0 0.0
        %562 = vmatpush1.msra.mxu0 0.0
        %563 = vmatprep.subr.mxu0 0.0
        %564 = vmatpush1.msra.mxu0 0.0
        %565 = vmatprep.subr.mxu0 0.0
        %566 = vmatpush1.msra.mxu0 0.0
        %567 = vmatprep.subr.mxu0 0.0
        %568 = vmatpush1.msra.mxu0 0.0
        %569 = vmatprep.subr.mxu0 0.0
        %570 = vmatpush1.msra.mxu0 0.0
        %571 = vmatprep.subr.mxu0 0.0
        %572 = vmatpush1.msra.mxu0 0.0
        %573 = vmatprep.subr.mxu0 0.0
        %574 = vmatpush1.msra.mxu0 0.0
        %575 = vmatprep.subr.mxu0 0.0
        %576 = vmatpush1.msra.mxu0 0.0
        %577 = vmatprep.subr.mxu0 0.0
        %578 = vmatpush1.msra.mxu0 0.0
        %579 = vmatprep.subr.mxu0 0.0
        %580 = vmatpush1.msra.mxu0 0.0
        %581 = vmatprep.subr.mxu0 0.0
        %582 = vmatpush1.msra.mxu0 0.0
        %583 = vmatprep.subr.mxu0 0.0
        %584 = vmatpush1.msra.mxu0 %v549
        %585 = vmatprep.subr.mxu0 0.0
        %586 = vmatpush2.msra.mxu0 0.0
        %587 = vmatprep.subr.mxu0 0.0
        %588 = vmatpush2.msra.mxu0 0.0
        %589 = vmatprep.subr.mxu0 0.0
        %590 = vmatpush2.msra.mxu0 0.0
        %591 = vmatprep.subr.mxu0 0.0
        %592 = vmatpush2.msra.mxu0 0.0
        %593 = vmatprep.subr.mxu0 0.0
        %594 = vmatpush2.msra.mxu0 0.0
        %595 = vmatprep.subr.mxu0 0.0
        %596 = vmatpush2.msra.mxu0 0.0
        %597 = vmatprep.subr.mxu0 0.0
        %598 = vmatpush2.msra.mxu0 0.0
        %599 = vmatprep.subr.mxu0 0.0
        %600 = vmatpush2.msra.mxu0 0.0
        %601 = vmatprep.subr.mxu0 0.0
        %602 = vmatpush2.msra.mxu0 0.0
        %603 = vmatprep.subr.mxu0 0.0
        %604 = vmatpush2.msra.mxu0 0.0
        %605 = vmatprep.subr.mxu0 0.0
        %606 = vmatpush2.msra.mxu0 0.0
        %607 = vmatprep.subr.mxu0 0.0
        %608 = vmatpush2.msra.mxu0 0.0
        %609 = vmatprep.subr.mxu0 0.0
        %610 = vmatpush2.msra.mxu0 0.0
        %611 = vmatprep.subr.mxu0 0.0
        %612 = vmatpush2.msra.mxu0 0.0
        %613 = vmatprep.subr.mxu0 0.0
        %614 = vmatpush2.msra.mxu0 0.0
        %615 = vmatprep.subr.mxu0 0.0
        %616 = vmatpush2.msra.mxu0 0.0
        %617 = vmatprep.mubr.f32.mxu0 0.0
        %618 = vmatmul.mubr.f32.gmra.mxu0 %v551
        %v619 = vpop.f32.mrf.mxu0
        %v620 = vadd.f32 0.0, %v619
        %v621 = vpop.f32.mrf.mxu0
        %622 = vdwg.mxu0
        %p623 = scmp.eq.s32.totalorder %s30, 0
        // Predicated region
        $region45: #{tpu_custom_call.1} parent=39 // pred_check
          %p624 = pneg %p623
        $region46: #{tpu_custom_call.1} parent=39 // pred_check_branch
          %626 = sbr.rel (%p624) target = $region48
        $region47: #{tpu_custom_call.1} parent=39 // pred_region
          %v627 = vld [vmem:[%s4] sm:$0x1]
          %v629 = vlaneseq
          %v630 = vshrl.u32 %v629, 7
          %v631 = vsub.s32 0, %v630
          %v632 = vrot.slane %v627, %v631
          %v634 = vadd.f32 %v620, %v632
          %s635 = scalar_lea.vmem %s269, %s376 [#allocation3]
          %vm636 = vcmask 261120
          %637 = vst.msk [vmem:[%s635] sm:$0xff] %vm636, %v634
        $region48: #{tpu_custom_call.1} parent=39 // pred_fallthru
          _
        %p638 = scmp.ne.s32.totalorder %s30, 0
        // Predicated region
        $region49: #{tpu_custom_call.1} parent=39 // pred_check
          %p639 = pneg %p638
        $region50: #{tpu_custom_call.1} parent=39 // pred_check_branch
          %641 = sbr.rel (%p639) target = $region52
        $region51: #{tpu_custom_call.1} parent=39 // pred_region
          %s642 = scalar_lea.vmem %s269, %s376 [#allocation3]
          %v643 = vld [vmem:[%s642] sm:$0xff]
          %v644 = vadd.f32 %v643, %v620
          %vm645 = vcmask 261120
          %646 = vst.msk [vmem:[%s642] sm:$0xff] %vm645, %v644
        $region52: #{tpu_custom_call.1} parent=39 // pred_fallthru
          _
        %s647 = sand.u32 %s161, 1
        %s648 = scalar_lea.sflag [#allocation4], %s647
        %s649 = sand.u32 %s161, 1
        %s650 = smul.addr %s649, 8
        %s651 = scalar_lea.vmem [#allocation3], %s650
        %s652 = sand.u32 %s191, 1
        %s653 = scalar_lea.sflag [#allocation6], %s652
        %s654 = sand.u32 %s191, 1
        %s655 = smul.addr %s654, 8
        %s656 = scalar_lea.vmem [#allocation5], %s655
        // Predicated region
        $region53: #{tpu_custom_call.1} parent=39 // pred_check
          %p657 = pneg %p171
        $region54: #{tpu_custom_call.1} parent=39 // pred_check_branch
          %659 = sbr.rel (%p657) target = $region56
        $region55: #{tpu_custom_call.1} parent=39 // pred_region
          %s661 = ssub.s32 128, 128
          %662 = vsyncadd %s648, %s661
          %s663 = smul.addr %s29, 128
          %s664 = scalar_lea.hbm %s5, %s663
          %s666 = sshll.u32 %s651, 4
          %s667 = int_to_ptr.vmem [resolvable:$true] %s666
          %669 = dma.vmem_to_hbm [thread:$0]  %s667, 128, %s664, %s648
        $region56: #{tpu_custom_call.1} parent=39 // pred_fallthru
          _
        // Predicated region
        $region57: #{tpu_custom_call.1} parent=39 // pred_check
          %p670 = pneg %p201
        $region58: #{tpu_custom_call.1} parent=39 // pred_check_branch
          %672 = sbr.rel (%p670) target = $region60
        $region59: #{tpu_custom_call.1} parent=39 // pred_region
          %s674 = ssub.s32 128, 128
          %675 = vsyncadd %s653, %s674
          %s676 = sadd.s32 %s31, %s30
          %s677 = smul.addr %s29, 4
          %s678 = sadd.s32 %s676, %s677
          %s679 = smul.addr %s678, 128
          %s680 = scalar_lea.hbm %s6, %s679
          %s682 = sshll.u32 %s656, 4
          %s683 = int_to_ptr.vmem [resolvable:$true] %s682
          %685 = dma.vmem_to_hbm [thread:$0]  %s683, 128, %s680, %s653
        $region60: #{tpu_custom_call.1} parent=39 // pred_fallthru
          _
      $region40: #{tpu_custom_call.1} parent=5 // pred_fallthru
        _
      %p686 = scmp.le.s32.totalorder 2, %s19
      // Predicated region
      $region61: #{tpu_custom_call.1} parent=5 // pred_check
        %p687 = pneg %p686
      $region62: #{tpu_custom_call.1} parent=5 // pred_check_branch
        %689 = sbr.rel (%p687) target = $region64
      $region63: #{tpu_custom_call.1} parent=5 // pred_region
        %s690 = ssub.s32 %s19, 2
        // Predicated region
        $region65: #{tpu_custom_call.1} parent=63 // pred_check
          %p691 = pneg %p177
        $region66: #{tpu_custom_call.1} parent=63 // pred_check_branch
          %693 = sbr.rel (%p691) target = $region68
        $region67: #{tpu_custom_call.1} parent=63 // pred_region
          %s694 = sand.u32 %s162, 1
          %s695 = scalar_lea.sflag [#allocation4], %s694
          %s696 = sand.u32 %s162, 1
          %s697 = smul.addr %s696, 8
          %s698 = scalar_lea.vmem [#allocation3], %s697
          %699 = dma.done %s695, 128
        $region68: #{tpu_custom_call.1} parent=63 // pred_fallthru
          _
        // Predicated region
        $region69: #{tpu_custom_call.1} parent=63 // pred_check
          %p700 = pneg %p207
        $region70: #{tpu_custom_call.1} parent=63 // pred_check_branch
          %702 = sbr.rel (%p700) target = $region72
        $region71: #{tpu_custom_call.1} parent=63 // pred_region
          %s703 = sand.u32 %s192, 1
          %s704 = scalar_lea.sflag [#allocation6], %s703
          %s705 = sand.u32 %s192, 1
          %s706 = smul.addr %s705, 8
          %s707 = scalar_lea.vmem [#allocation5], %s706
          %708 = dma.done %s704, 128
        $region72: #{tpu_custom_call.1} parent=63 // pred_fallthru
          _
      $region64: #{tpu_custom_call.1} parent=5 // pred_fallthru
        _
    $region6: #{tpu_custom_call.1} parent=1 // loop_footer
      %s23 = sadd.s32 1, %s19
    $region7: #{tpu_custom_call.1} parent=1 // loop_footer_branch
      %18 = sbr.rel target = $region3
    $region8: #{tpu_custom_call.1} parent=1 // loop_exit
      _
    %709 = vsyncpa [#allocation4], 1
    %s710 = scalar_lea.sflag [#allocation4], 1
    %711 = vsyncpa %s710, 1
    %712 = vsyncpa [#allocation6], 1
    %s713 = scalar_lea.sflag [#allocation6], 1
    %714 = vsyncpa %s713, 1

// kernel: tpu_custom_call.1
$region0: #{tpu_custom_call.1}
  #allocation0 [shape = 'u32[]', space=smem, size = 0x4, offset = 0x4, fixed_abs, tag = 'smem constant byte address 0x4 - core index']
  #allocation1 [shape = 'u32[144,128]{1,0:T(1,128)}', space=vmem, size = 0x12000, scoped, tag = 'internal scratch']
  #allocation2 [shape = 'f32[8,24]{1,0:T(8,128)}', space=vmem, size = 0x1000, scoped, tag = 'scratch operand']
  %s0 = inlined_call_operand.vmem [shape: f32[2,8,32], index: 0, kind: input, shape index: {}]
  %s1 = inlined_call_operand.vmem [shape: f32[4,32,24], index: 1, kind: input, shape index: {}]
  %s2 = inlined_call_operand.vmem [shape: f32[4,1,24], index: 2, kind: input, shape index: {}]
  %s3 = inlined_call_operand.vmem [shape: f32[4,8,32], index: 3, kind: input, shape index: {}]
  %s4 = inlined_call_operand.vmem [shape: f32[1,32], index: 4, kind: input, shape index: {}]
  %s5 = inlined_call_operand.hbm [shape: f32[2,8,32], index: 5, kind: output, shape index: {0}]
  %s6 = inlined_call_operand.hbm [shape: f32[2,4,8,8], index: 6, kind: output, shape index: {1}]
  %7 = xla_tuple %s5, %s6
  %s8 = sld [smem:[#allocation0]]
  $region73: #{tpu_custom_call.1} parent=0
    _
  %s10 = ssub.s32 1, %s8
  %s11 = scalar_select 0, %s10, %s8
  $region1: #{tpu_custom_call.1} parent=0
    #allocation3 [shape = 'u8[8192]{0}', space=vmem, size = 0x2000, scoped, tag = 'output window, operand 0']
    #allocation4 [shape = 's32[2]{0}', space=sflag, size = 0x8, scoped, tag = 'scoped memory for tpu_custom_call.1']
    #allocation5 [shape = 'u8[8192]{0}', space=vmem, size = 0x2000, scoped, tag = 'output window, operand 1']
    #allocation6 [shape = 's32[2]{0}', space=sflag, size = 0x8, scoped, tag = 'scoped memory for tpu_custom_call.1']
    %12 = vsyncpa [#allocation4], 0
    %s13 = scalar_lea.sflag [#allocation4], 1
    %14 = vsyncpa %s13, 0
    %15 = vsyncpa [#allocation6], 0
    %s16 = scalar_lea.sflag [#allocation6], 1
    %17 = vsyncpa %s16, 0
    loop: start=0, step=1, limit=10
    $region2: #{tpu_custom_call.1} parent=1 // loop_pre_header
      _
    $region3: #{tpu_custom_call.1} parent=1 // loop_header
      %s19 = sphi 0, %s23
      %p20 = scmp.ge.s32.totalorder %s19, 10
      %s26 = sphi 0, %s45
      %s27 = sphi 0, %s41
      %s28 = sphi 0, %s37
      %s29 = sphi 0, %s26
      %s30 = sphi 0, %s27
      %s31 = sphi 0, %s28
      %s32 = sphi 0, %s29
      %s33 = sphi 0, %s30
      %s34 = sphi 0, %s31
      %s48 = sphi 0, %s50
      %s51 = sphi 0, %s48
      %s52 = sphi 0, %s51
      %s68 = sphi 0, %s52
      %s72 = sphi 0, %s72
      %s74 = sphi 0, %s72
      %s75 = sphi 0, %s74
      %s89 = sphi 0, %s75
      %s93 = sphi 0, %s93
      %s95 = sphi 0, %s93
      %s96 = sphi 0, %s95
      %s110 = sphi 0, %s96
      %s114 = sphi 0, %s114
      %s116 = sphi 0, %s114
      %s117 = sphi 0, %s116
      %s131 = sphi 0, %s117
      %s135 = sphi 0, %s135
      %s137 = sphi 0, %s135
      %s138 = sphi 0, %s137
      %s152 = sphi 0, %s138
      %s158 = sphi 0, %s160
      %s161 = sphi 0, %s158
      %s162 = sphi 0, %s161
      %s178 = sphi 0, %s162
      %s188 = sphi 0, %s190
      %s191 = sphi 0, %s188
      %s192 = sphi 0, %s191
      %s208 = sphi 0, %s192
    $region4: #{tpu_custom_call.1} parent=1 // loop_header_branch
      %22 = sbr.rel (%p20) target = $region8
    $region5: #{tpu_custom_call.1} parent=1 // loop_body
      %s24 = ssub.s32 %s19, 1
      %s25 = ssub.s32 %s19, 2
      %s35 = sadd.s32 1, %s28
      %p36 = scmp.ge.s32.totalorder %s35, 1
      %s37 = scalar_select %p36, 0, %s35
      %s38 = sadd.s32 1, %s27
      %s39 = scalar_select %p36, %s38, %s27
      %p40 = scmp.ge.s32.totalorder %s39, 4
      %s41 = scalar_select %p40, 0, %s39
      %s42 = sadd.s32 1, %s26
      %s43 = scalar_select %p40, %s42, %s26
      %p44 = scmp.ge.s32.totalorder %s43, 2
      %s45 = scalar_select %p44, 0, %s43
      %s46 = ssub.s32 %s26, %s45
      %p47 = scmp.eq.s32.totalorder %s46, 0
      %s49 = sadd.s32 %s48, 1
      %s50 = scalar_select %p47, %s48, %s49
      %p53 = pneg %p47
      %p54 = scmp.eq.s32.totalorder %s19, 7
      %p55 = por %p53, %p54
      %p56 = scmp.ne.s32.totalorder %s48, %s51
      %p57 = scmp.eq.s32.totalorder %s19, 0
      %p58 = por %p56, %p57
      %p59 = scmp.ne.s32.totalorder %s48, %s51
      %p60 = scmp.eq.s32.totalorder %s24, 7
      %p61 = por %p59, %p60
      %p62 = scmp.ne.s32.totalorder %s51, %s52
      %p63 = scmp.eq.s32.totalorder %s24, 0
      %p64 = por %p62, %p63
      %p65 = scmp.ne.s32.totalorder %s51, %s52
      %p66 = scmp.eq.s32.totalorder %s25, 7
      %p67 = por %p65, %p66
      %p69 = scmp.ne.s32.totalorder %s52, %s68
      %p70 = scmp.eq.s32.totalorder %s25, 0
      %p71 = por %p69, %p70
      %s73 = sadd.s32 %s72, 1
      %p76 = scmp.eq.s32.totalorder %s19, 7
      %p77 = scmp.ne.s32.totalorder %s72, %s74
      %p78 = scmp.eq.s32.totalorder %s19, 0
      %p79 = por %p77, %p78
      %p80 = scmp.ne.s32.totalorder %s72, %s74
      %p81 = scmp.eq.s32.totalorder %s24, 7
      %p82 = por %p80, %p81
      %p83 = scmp.ne.s32.totalorder %s74, %s75
      %p84 = scmp.eq.s32.totalorder %s24, 0
      %p85 = por %p83, %p84
      %p86 = scmp.ne.s32.totalorder %s74, %s75
      %p87 = scmp.eq.s32.totalorder %s25, 7
      %p88 = por %p86, %p87
      %p90 = scmp.ne.s32.totalorder %s75, %s89
      %p91 = scmp.eq.s32.totalorder %s25, 0
      %p92 = por %p90, %p91
      %s94 = sadd.s32 %s93, 1
      %p97 = scmp.eq.s32.totalorder %s19, 7
      %p98 = scmp.ne.s32.totalorder %s93, %s95
      %p99 = scmp.eq.s32.totalorder %s19, 0
      %p100 = por %p98, %p99
      %p101 = scmp.ne.s32.totalorder %s93, %s95
      %p102 = scmp.eq.s32.totalorder %s24, 7
      %p103 = por %p101, %p102
      %p104 = scmp.ne.s32.totalorder %s95, %s96
      %p105 = scmp.eq.s32.totalorder %s24, 0
      %p106 = por %p104, %p105
      %p107 = scmp.ne.s32.totalorder %s95, %s96
      %p108 = scmp.eq.s32.totalorder %s25, 7
      %p109 = por %p107, %p108
      %p111 = scmp.ne.s32.totalorder %s96, %s110
      %p112 = scmp.eq.s32.totalorder %s25, 0
      %p113 = por %p111, %p112
      %s115 = sadd.s32 %s114, 1
      %p118 = scmp.eq.s32.totalorder %s19, 7
      %p119 = scmp.ne.s32.totalorder %s114, %s116
      %p120 = scmp.eq.s32.totalorder %s19, 0
      %p121 = por %p119, %p120
      %p122 = scmp.ne.s32.totalorder %s114, %s116
      %p123 = scmp.eq.s32.totalorder %s24, 7
      %p124 = por %p122, %p123
      %p125 = scmp.ne.s32.totalorder %s116, %s117
      %p126 = scmp.eq.s32.totalorder %s24, 0
      %p127 = por %p125, %p126
      %p128 = scmp.ne.s32.totalorder %s116, %s117
      %p129 = scmp.eq.s32.totalorder %s25, 7
      %p130 = por %p128, %p129
      %p132 = scmp.ne.s32.totalorder %s117, %s131
      %p133 = scmp.eq.s32.totalorder %s25, 0
      %p134 = por %p132, %p133
      %s136 = sadd.s32 %s135, 1
      %p139 = scmp.eq.s32.totalorder %s19, 7
      %p140 = scmp.ne.s32.totalorder %s135, %s137
      %p141 = scmp.eq.s32.totalorder %s19, 0
      %p142 = por %p140, %p141
      %p143 = scmp.ne.s32.totalorder %s135, %s137
      %p144 = scmp.eq.s32.totalorder %s24, 7
      %p145 = por %p143, %p144
      %p146 = scmp.ne.s32.totalorder %s137, %s138
      %p147 = scmp.eq.s32.totalorder %s24, 0
      %p148 = por %p146, %p147
      %p149 = scmp.ne.s32.totalorder %s137, %s138
      %p150 = scmp.eq.s32.totalorder %s25, 7
      %p151 = por %p149, %p150
      %p153 = scmp.ne.s32.totalorder %s138, %s152
      %p154 = scmp.eq.s32.totalorder %s25, 0
      %p155 = por %p153, %p154
      %s156 = ssub.s32 %s26, %s45
      %p157 = scmp.eq.s32.totalorder %s156, 0
      %s159 = sadd.s32 %s158, 1
      %s160 = scalar_select %p157, %s158, %s159
      %p163 = pneg %p157
      %p164 = scmp.eq.s32.totalorder %s19, 7
      %p165 = por %p163, %p164
      %p166 = scmp.ne.s32.totalorder %s158, %s161
      %p167 = scmp.eq.s32.totalorder %s19, 0
      %p168 = por %p166, %p167
      %p169 = scmp.ne.s32.totalorder %s158, %s161
      %p170 = scmp.eq.s32.totalorder %s24, 7
      %p171 = por %p169, %p170
      %p172 = scmp.ne.s32.totalorder %s161, %s162
      %p173 = scmp.eq.s32.totalorder %s24, 0
      %p174 = por %p172, %p173
      %p175 = scmp.ne.s32.totalorder %s161, %s162
      %p176 = scmp.eq.s32.totalorder %s25, 7
      %p177 = por %p175, %p176
      %p179 = scmp.ne.s32.totalorder %s162, %s178
      %p180 = scmp.eq.s32.totalorder %s25, 0
      %p181 = por %p179, %p180
      %s182 = ssub.s32 %s26, %s45
      %s183 = ssub.s32 %s27, %s41
      %s184 = sor.u32 %s182, %s183
      %s185 = ssub.s32 %s28, %s37
      %s186 = sor.u32 %s184, %s185
      %p187 = scmp.eq.s32.totalorder %s186, 0
      %s189 = sadd.s32 %s188, 1
      %s190 = scalar_select %p187, %s188, %s189
      %p193 = pneg %p187
      %p194 = scmp.eq.s32.totalorder %s19, 7
      %p195 = por %p193, %p194
      %p196 = scmp.ne.s32.totalorder %s188, %s191
      %p197 = scmp.eq.s32.totalorder %s19, 0
      %p198 = por %p196, %p197
      %p199 = scmp.ne.s32.totalorder %s188, %s191
      %p200 = scmp.eq.s32.totalorder %s24, 7
      %p201 = por %p199, %p200
      %p202 = scmp.ne.s32.totalorder %s191, %s192
      %p203 = scmp.eq.s32.totalorder %s24, 0
      %p204 = por %p202, %p203
      %p205 = scmp.ne.s32.totalorder %s191, %s192
      %p206 = scmp.eq.s32.totalorder %s25, 7
      %p207 = por %p205, %p206
      %p209 = scmp.ne.s32.totalorder %s192, %s208
      %p210 = scmp.eq.s32.totalorder %s25, 0
      %p211 = por %p209, %p210
      %p212 = scmp.le.s32.totalorder 1, %s19
      %p213 = scmp.lt.s32.totalorder %s19, 9
      %p214 = pnand %p212, %p213
      %p215 = pneg %p214
      // Predicated region
      $region9: #{tpu_custom_call.1} parent=5 // pred_check
        _
      $region10: #{tpu_custom_call.1} parent=5 // pred_check_branch
        %217 = sbr.rel (%p214) target = $region12
      $region11: #{tpu_custom_call.1} parent=5 // pred_region
        %s218 = ssub.s32 %s19, 1
        // Predicated region
        $region13: #{tpu_custom_call.1} parent=11 // pred_check
          %p219 = pneg %p85
        $region14: #{tpu_custom_call.1} parent=11 // pred_check_branch
          %221 = sbr.rel (%p219) target = $region16
        $region15: #{tpu_custom_call.1} parent=11 // pred_region
          _
        $region16: #{tpu_custom_call.1} parent=11 // pred_fallthru
          _
        // Predicated region
        $region17: #{tpu_custom_call.1} parent=11 // pred_check
          %p222 = pneg %p106
        $region18: #{tpu_custom_call.1} parent=11 // pred_check_branch
          %224 = sbr.rel (%p222) target = $region20
        $region19: #{tpu_custom_call.1} parent=11 // pred_region
          _
        $region20: #{tpu_custom_call.1} parent=11 // pred_fallthru
          _
        // Predicated region
        $region21: #{tpu_custom_call.1} parent=11 // pred_check
          %p225 = pneg %p127
        $region22: #{tpu_custom_call.1} parent=11 // pred_check_branch
          %227 = sbr.rel (%p225) target = $region24
        $region23: #{tpu_custom_call.1} parent=11 // pred_region
          _
        $region24: #{tpu_custom_call.1} parent=11 // pred_fallthru
          _
        // Predicated region
        $region25: #{tpu_custom_call.1} parent=11 // pred_check
          %p228 = pneg %p148
        $region26: #{tpu_custom_call.1} parent=11 // pred_check_branch
          %230 = sbr.rel (%p228) target = $region28
        $region27: #{tpu_custom_call.1} parent=11 // pred_region
          _
        $region28: #{tpu_custom_call.1} parent=11 // pred_fallthru
          _
      $region12: #{tpu_custom_call.1} parent=5 // pred_fallthru
        _
      %p231 = scmp.lt.s32.totalorder %s19, 8
      // Predicated region
      $region29: #{tpu_custom_call.1} parent=5 // pred_check
        %p232 = pneg %p231
      $region30: #{tpu_custom_call.1} parent=5 // pred_check_branch
        %234 = sbr.rel (%p232) target = $region32
      $region31: #{tpu_custom_call.1} parent=5 // pred_region
        // Predicated region
        $region33: #{tpu_custom_call.1} parent=31 // pred_check
          %p235 = pneg %p58
        $region34: #{tpu_custom_call.1} parent=31 // pred_check_branch
          %237 = sbr.rel (%p235) target = $region36
        $region35: #{tpu_custom_call.1} parent=31 // pred_region
          %p238 = scmp.lt.s32.totalorder %s26, 1
          %s239 = scalar_select %p238, %s26, 1
          %s240 = smul.addr %s239, 8
          %s241 = scalar_lea.vmem %s0, %s240
        $region36: #{tpu_custom_call.1} parent=31 // pred_fallthru
          _
      $region32: #{tpu_custom_call.1} parent=5 // pred_fallthru
        _
      %p242 = scmp.le.s32.totalorder 1, %s19
      %p243 = scmp.lt.s32.totalorder %s19, 9
      %p244 = pnand %p242, %p243
      %p245 = pneg %p244
      // Predicated region
      $region37: #{tpu_custom_call.1} parent=5 // pred_check
        _
      $region38: #{tpu_custom_call.1} parent=5 // pred_check_branch
        %247 = sbr.rel (%p244) target = $region40
      $region39: #{tpu_custom_call.1} parent=5 // pred_region
        %s248 = ssub.s32 %s19, 1
        %p249 = scmp.lt.s32.totalorder %s29, 1
        %s250 = scalar_select %p249, %s29, 1
        %s251 = smul.addr %s250, 8
        %s252 = scalar_lea.vmem %s0, %s251
        %p253 = pneg %p64
        %p254 = pneg %p61
        %p255 = pneg %p85
        %p256 = pneg %p82
        %p257 = pneg %p106
        %p258 = pneg %p103
        %p259 = pneg %p127
        %p260 = pneg %p124
        %p261 = pneg %p148
        %p262 = pneg %p145
        %p263 = pneg %p174
        %p264 = pneg %p171
        %s265 = sand.u32 %s161, 1
        %s266 = scalar_lea.sflag [#allocation4], %s265
        %s267 = sand.u32 %s161, 1
        %s268 = smul.addr %s267, 8
        %s269 = scalar_lea.vmem [#allocation3], %s268
        %p270 = pneg %p204
        %p271 = pneg %p201
        %s272 = sand.u32 %s191, 1
        %s273 = scalar_lea.sflag [#allocation6], %s272
        %s274 = sand.u32 %s191, 1
        %s275 = smul.addr %s274, 8
        %s276 = scalar_lea.vmem [#allocation5], %s275
        %p277 = scmp.lt.s32.totalorder %s29, 1
        %s278 = scalar_select %p277, %s29, 1
        %s279 = smul.addr %s278, 8
        %s280 = scalar_lea.vmem %s0, %s279
        %p281 = scmp.eq.s32.totalorder %s31, 0
        // Predicated region
        $region41: #{tpu_custom_call.1} parent=39 // pred_check
          %p282 = pneg %p281
        $region42: #{tpu_custom_call.1} parent=39 // pred_check_branch
          %284 = sbr.rel (%p282) target = $region44
        $region43: #{tpu_custom_call.1} parent=39 // pred_region
          %s285 = smul.u32 %s30, 32
          %s286 = scalar_lea.vmem %s1, %s285
          %v287 = vld [vmem:[%s286] sm:$0xff]
          %v288 = vld [vmem:[%s286 + $0x8] sm:$0xff]
          %v289 = vld [vmem:[%s286 + $0x10] sm:$0xff]
          %v290 = vld [vmem:[%s286 + $0x18] sm:$0xff]
          %s291 = scalar_lea.vmem %s2, %s30
          %v292 = vld [vmem:[%s291] sm:$0x1]
          %v293 = vld [vmem:[%s280] sm:$0xff]
          %v295 = vlaneseq
          %v296 = vshrl.u32 %v295, 7
          %v297 = vsub.s32 0, %v296
          %v298 = vrot.slane %v292, %v297
          %vm300 = vcmask 261120
          %v302 = vsel %vm300, %v293, 0
          %304 = vmatprep.subr.mxu0 0.0
          %305 = vmatpush1.msra.mxu0 0.0
          %306 = vmatprep.subr.mxu0 0.0
          %307 = vmatpush1.msra.mxu0 0.0
          %308 = vmatprep.subr.mxu0 0.0
          %309 = vmatpush1.msra.mxu0 0.0
          %310 = vmatprep.subr.mxu0 0.0
          %311 = vmatpush1.msra.mxu0 0.0
          %312 = vmatprep.subr.mxu0 0.0
          %313 = vmatpush1.msra.mxu0 0.0
          %314 = vmatprep.subr.mxu0 0.0
          %315 = vmatpush1.msra.mxu0 0.0
          %316 = vmatprep.subr.mxu0 0.0
          %317 = vmatpush1.msra.mxu0 0.0
          %318 = vmatprep.subr.mxu0 0.0
          %319 = vmatpush1.msra.mxu0 0.0
          %320 = vmatprep.subr.mxu0 0.0
          %321 = vmatpush1.msra.mxu0 0.0
          %322 = vmatprep.subr.mxu0 0.0
          %323 = vmatpush1.msra.mxu0 0.0
          %324 = vmatprep.subr.mxu0 0.0
          %325 = vmatpush1.msra.mxu0 0.0
          %326 = vmatprep.subr.mxu0 0.0
          %327 = vmatpush1.msra.mxu0 0.0
          %328 = vmatprep.subr.mxu0 0.0
          %329 = vmatpush1.msra.mxu0 %v290
          %330 = vmatprep.subr.mxu0 0.0
          %331 = vmatpush1.msra.mxu0 %v289
          %332 = vmatprep.subr.mxu0 0.0
          %333 = vmatpush1.msra.mxu0 %v288
          %334 = vmatprep.subr.mxu0 0.0
          %335 = vmatpush1.msra.mxu0 %v287
          %336 = vmatprep.subr.mxu0 0.0
          %337 = vmatpush2.msra.mxu0 0.0
          %338 = vmatprep.subr.mxu0 0.0
          %339 = vmatpush2.msra.mxu0 0.0
          %340 = vmatprep.subr.mxu0 0.0
          %341 = vmatpush2.msra.mxu0 0.0
          %342 = vmatprep.subr.mxu0 0.0
          %343 = vmatpush2.msra.mxu0 0.0
          %344 = vmatprep.subr.mxu0 0.0
          %345 = vmatpush2.msra.mxu0 0.0
          %346 = vmatprep.subr.mxu0 0.0
          %347 = vmatpush2.msra.mxu0 0.0
          %348 = vmatprep.subr.mxu0 0.0
          %349 = vmatpush2.msra.mxu0 0.0
          %350 = vmatprep.subr.mxu0 0.0
          %351 = vmatpush2.msra.mxu0 0.0
          %352 = vmatprep.subr.mxu0 0.0
          %353 = vmatpush2.msra.mxu0 0.0
          %354 = vmatprep.subr.mxu0 0.0
          %355 = vmatpush2.msra.mxu0 0.0
          %356 = vmatprep.subr.mxu0 0.0
          %357 = vmatpush2.msra.mxu0 0.0
          %358 = vmatprep.subr.mxu0 0.0
          %359 = vmatpush2.msra.mxu0 0.0
          %360 = vmatprep.subr.mxu0 0.0
          %361 = vmatpush2.msra.mxu0 0.0
          %362 = vmatprep.subr.mxu0 0.0
          %363 = vmatpush2.msra.mxu0 0.0
          %364 = vmatprep.subr.mxu0 0.0
          %365 = vmatpush2.msra.mxu0 0.0
          %366 = vmatprep.subr.mxu0 0.0
          %367 = vmatpush2.msra.mxu0 0.0
          %368 = vmatprep.mubr.f32.mxu0 0.0
          %369 = vmatmul.mubr.f32.gmra.mxu0 %v302
          %v370 = vpop.f32.mrf.mxu0
          %v371 = vadd.f32 %v298, %v370
          %v372 = vpop.f32.mrf.mxu0
          %373 = vdwg.mxu0
          %vm374 = vcmask 195584
          %375 = vst.msk [vmem:[#allocation2] sm:$0xff] %vm374, %v371
        $region44: #{tpu_custom_call.1} parent=39 // pred_fallthru
          _
        %s376 = smul.u32 %s31, 8
        %s377 = scalar_lea.vmem [#allocation2], %s376
        %v378 = vld [vmem:[%s377] sm:$0xff]
        %v379 = vld [vmem:[#allocation2] sm:$0xff]
        %381 = vrot.lane.b32.xlu0 %v379, 120
        %v382 = vpop.permute.xlu0 %381
        %vm383 = vcmask 64512
        %v385 = vsel %vm383, %v378, 0
        %v387 = vsel %vm383, %v382, 0
        %389 = vmatprep.subr.mxu0 0.0
        %390 = vmatpush1.xpose.msra.mxu0 0.0
        %391 = vmatprep.subr.mxu0 0.0
        %392 = vmatpush1.xpose.msra.mxu0 0.0
        %393 = vmatprep.subr.mxu0 0.0
        %394 = vmatpush1.xpose.msra.mxu0 0.0
        %395 = vmatprep.subr.mxu0 0.0
        %396 = vmatpush1.xpose.msra.mxu0 0.0
        %397 = vmatprep.subr.mxu0 0.0
        %398 = vmatpush1.xpose.msra.mxu0 0.0
        %399 = vmatprep.subr.mxu0 0.0
        %400 = vmatpush1.xpose.msra.mxu0 0.0
        %401 = vmatprep.subr.mxu0 0.0
        %402 = vmatpush1.xpose.msra.mxu0 0.0
        %403 = vmatprep.subr.mxu0 0.0
        %404 = vmatpush1.xpose.msra.mxu0 0.0
        %405 = vmatprep.subr.mxu0 0.0
        %406 = vmatpush1.xpose.msra.mxu0 0.0
        %407 = vmatprep.subr.mxu0 0.0
        %408 = vmatpush1.xpose.msra.mxu0 0.0
        %409 = vmatprep.subr.mxu0 0.0
        %410 = vmatpush1.xpose.msra.mxu0 0.0
        %411 = vmatprep.subr.mxu0 0.0
        %412 = vmatpush1.xpose.msra.mxu0 0.0
        %413 = vmatprep.subr.mxu0 0.0
        %414 = vmatpush1.xpose.msra.mxu0 0.0
        %415 = vmatprep.subr.mxu0 0.0
        %416 = vmatpush1.xpose.msra.mxu0 0.0
        %417 = vmatprep.subr.mxu0 0.0
        %418 = vmatpush1.xpose.msra.mxu0 0.0
        %419 = vmatprep.subr.mxu0 0.0
        %420 = vmatpush1.xpose.msra.mxu0 %v387
        %421 = vmatprep.subr.mxu0 0.0
        %422 = vmatpush2.xpose.msra.mxu0 0.0
        %423 = vmatprep.subr.mxu0 0.0
        %424 = vmatpush2.xpose.msra.mxu0 0.0
        %425 = vmatprep.subr.mxu0 0.0
        %426 = vmatpush2.xpose.msra.mxu0 0.0
        %427 = vmatprep.subr.mxu0 0.0
        %428 = vmatpush2.xpose.msra.mxu0 0.0
        %429 = vmatprep.subr.mxu0 0.0
        %430 = vmatpush2.xpose.msra.mxu0 0.0
        %431 = vmatprep.subr.mxu0 0.0
        %432 = vmatpush2.xpose.msra.mxu0 0.0
        %433 = vmatprep.subr.mxu0 0.0
        %434 = vmatpush2.xpose.msra.mxu0 0.0
        %435 = vmatprep.subr.mxu0 0.0
        %436 = vmatpush2.xpose.msra.mxu0 0.0
        %437 = vmatprep.subr.mxu0 0.0
        %438 = vmatpush2.xpose.msra.mxu0 0.0
        %439 = vmatprep.subr.mxu0 0.0
        %440 = vmatpush2.xpose.msra.mxu0 0.0
        %441 = vmatprep.subr.mxu0 0.0
        %442 = vmatpush2.xpose.msra.mxu0 0.0
        %443 = vmatprep.subr.mxu0 0.0
        %444 = vmatpush2.xpose.msra.mxu0 0.0
        %445 = vmatprep.subr.mxu0 0.0
        %446 = vmatpush2.xpose.msra.mxu0 0.0
        %447 = vmatprep.subr.mxu0 0.0
        %448 = vmatpush2.xpose.msra.mxu0 0.0
        %449 = vmatprep.subr.mxu0 0.0
        %450 = vmatpush2.xpose.msra.mxu0 0.0
        %451 = vmatprep.subr.mxu0 0.0
        %452 = vmatpush2.xpose.msra.mxu0 0.0
        %453 = vmatprep.mubr.f32.mxu0 0.0
        %454 = vmatmul.mubr.f32.gmra.mxu0 %v385
        %v455 = vpop.f32.mrf.mxu0
        %v456 = vadd.f32 0.0, %v455
        %v457 = vpop.f32.mrf.mxu0
        %458 = vdwg.mxu0
        %v459 = vsel %vm383, %v456, -inf
        %460 = vmax.xlane.f32.xlu0 %v459
        %v461 = vpop.xlane.xlu0 %460
        %v462 = vsub.f32 %v456, %v461
        %v463 = vmul.f32 %v462, 1.442695
        %v464 = vpow.pop %v463
        %v465 = vsel %vm383, %v464, 0.0
        %466 = vadd.xlane.f32.xlu0 %v465
        %v467 = vpop.xlane.xlu0 %466
        %v468 = vrcp.pop %v467
        %v469 = vmul.f32 %v464, %v468
        %470 = vst.msk [vmem:[%s276] sm:$0xff] %vm383, %v469
        %471 = vrot.lane.b32.xlu0 %v379, 112
        %v472 = vpop.permute.xlu0 %471
        %v475 = vsel %vm383, %v469, 0
        %477 = vmatprep.subr.mxu0 0.0
        %478 = vmatpush1.msra.mxu0 0.0
        %479 = vmatprep.subr.mxu0 0.0
        %480 = vmatpush1.msra.mxu0 0.0
        %481 = vmatprep.subr.mxu0 0.0
        %482 = vmatpush1.msra.mxu0 0.0
        %483 = vmatprep.subr.mxu0 0.0
        %484 = vmatpush1.msra.mxu0 0.0
        %485 = vmatprep.subr.mxu0 0.0
        %486 = vmatpush1.msra.mxu0 0.0
        %487 = vmatprep.subr.mxu0 0.0
        %488 = vmatpush1.msra.mxu0 0.0
        %489 = vmatprep.subr.mxu0 0.0
        %490 = vmatpush1.msra.mxu0 0.0
        %491 = vmatprep.subr.mxu0 0.0
        %492 = vmatpush1.msra.mxu0 0.0
        %493 = vmatprep.subr.mxu0 0.0
        %494 = vmatpush1.msra.mxu0 0.0
        %495 = vmatprep.subr.mxu0 0.0
        %496 = vmatpush1.msra.mxu0 0.0
        %497 = vmatprep.subr.mxu0 0.0
        %498 = vmatpush1.msra.mxu0 0.0
        %499 = vmatprep.subr.mxu0 0.0
        %500 = vmatpush1.msra.mxu0 0.0
        %501 = vmatprep.subr.mxu0 0.0
        %502 = vmatpush1.msra.mxu0 0.0
        %503 = vmatprep.subr.mxu0 0.0
        %504 = vmatpush1.msra.mxu0 0.0
        %505 = vmatprep.subr.mxu0 0.0
        %506 = vmatpush1.msra.mxu0 0.0
        %507 = vmatprep.subr.mxu0 0.0
        %508 = vmatpush1.msra.mxu0 %v472
        %509 = vmatprep.subr.mxu0 0.0
        %510 = vmatpush2.msra.mxu0 0.0
        %511 = vmatprep.subr.mxu0 0.0
        %512 = vmatpush2.msra.mxu0 0.0
        %513 = vmatprep.subr.mxu0 0.0
        %514 = vmatpush2.msra.mxu0 0.0
        %515 = vmatprep.subr.mxu0 0.0
        %516 = vmatpush2.msra.mxu0 0.0
        %517 = vmatprep.subr.mxu0 0.0
        %518 = vmatpush2.msra.mxu0 0.0
        %519 = vmatprep.subr.mxu0 0.0
        %520 = vmatpush2.msra.mxu0 0.0
        %521 = vmatprep.subr.mxu0 0.0
        %522 = vmatpush2.msra.mxu0 0.0
        %523 = vmatprep.subr.mxu0 0.0
        %524 = vmatpush2.msra.mxu0 0.0
        %525 = vmatprep.subr.mxu0 0.0
        %526 = vmatpush2.msra.mxu0 0.0
        %527 = vmatprep.subr.mxu0 0.0
        %528 = vmatpush2.msra.mxu0 0.0
        %529 = vmatprep.subr.mxu0 0.0
        %530 = vmatpush2.msra.mxu0 0.0
        %531 = vmatprep.subr.mxu0 0.0
        %532 = vmatpush2.msra.mxu0 0.0
        %533 = vmatprep.subr.mxu0 0.0
        %534 = vmatpush2.msra.mxu0 0.0
        %535 = vmatprep.subr.mxu0 0.0
        %536 = vmatpush2.msra.mxu0 0.0
        %537 = vmatprep.subr.mxu0 0.0
        %538 = vmatpush2.msra.mxu0 0.0
        %539 = vmatprep.subr.mxu0 0.0
        %540 = vmatpush2.msra.mxu0 0.0
        %541 = vmatprep.mubr.f32.mxu0 0.0
        %542 = vmatmul.mubr.f32.gmra.mxu0 %v475
        %v543 = vpop.f32.mrf.mxu0
        %v544 = vadd.f32 0.0, %v543
        %v545 = vpop.f32.mrf.mxu0
        %546 = vdwg.mxu0
        %s547 = smul.u32 %s30, 8
        %s548 = scalar_lea.vmem %s3, %s547
        %v549 = vld [vmem:[%s548] sm:$0xff]
        %v551 = vsel %vm383, %v544, 0
        %553 = vmatprep.subr.mxu0 0.0
        %554 = vmatpush1.msra.mxu0 0.0
        %555 = vmatprep.subr.mxu0 0.0
        %556 = vmatpush1.msra.mxu0 0.0
        %557 = vmatprep.subr.mxu0 0.0
        %558 = vmatpush1.msra.mxu0 0.0
        %559 = vmatprep.subr.mxu0 0.0
        %560 = vmatpush1.msra.mxu0 0.0
        %561 = vmatprep.subr.mxu0 0.0
        %562 = vmatpush1.msra.mxu0 0.0
        %563 = vmatprep.subr.mxu0 0.0
        %564 = vmatpush1.msra.mxu0 0.0
        %565 = vmatprep.subr.mxu0 0.0
        %566 = vmatpush1.msra.mxu0 0.0
        %567 = vmatprep.subr.mxu0 0.0
        %568 = vmatpush1.msra.mxu0 0.0
        %569 = vmatprep.subr.mxu0 0.0
        %570 = vmatpush1.msra.mxu0 0.0
        %571 = vmatprep.subr.mxu0 0.0
        %572 = vmatpush1.msra.mxu0 0.0
        %573 = vmatprep.subr.mxu0 0.0
        %574 = vmatpush1.msra.mxu0 0.0
        %575 = vmatprep.subr.mxu0 0.0
        %576 = vmatpush1.msra.mxu0 0.0
        %577 = vmatprep.subr.mxu0 0.0
        %578 = vmatpush1.msra.mxu0 0.0
        %579 = vmatprep.subr.mxu0 0.0
        %580 = vmatpush1.msra.mxu0 0.0
        %581 = vmatprep.subr.mxu0 0.0
        %582 = vmatpush1.msra.mxu0 0.0
        %583 = vmatprep.subr.mxu0 0.0
        %584 = vmatpush1.msra.mxu0 %v549
        %585 = vmatprep.subr.mxu0 0.0
        %586 = vmatpush2.msra.mxu0 0.0
        %587 = vmatprep.subr.mxu0 0.0
        %588 = vmatpush2.msra.mxu0 0.0
        %589 = vmatprep.subr.mxu0 0.0
        %590 = vmatpush2.msra.mxu0 0.0
        %591 = vmatprep.subr.mxu0 0.0
        %592 = vmatpush2.msra.mxu0 0.0
        %593 = vmatprep.subr.mxu0 0.0
        %594 = vmatpush2.msra.mxu0 0.0
        %595 = vmatprep.subr.mxu0 0.0
        %596 = vmatpush2.msra.mxu0 0.0
        %597 = vmatprep.subr.mxu0 0.0
        %598 = vmatpush2.msra.mxu0 0.0
        %599 = vmatprep.subr.mxu0 0.0
        %600 = vmatpush2.msra.mxu0 0.0
        %601 = vmatprep.subr.mxu0 0.0
        %602 = vmatpush2.msra.mxu0 0.0
        %603 = vmatprep.subr.mxu0 0.0
        %604 = vmatpush2.msra.mxu0 0.0
        %605 = vmatprep.subr.mxu0 0.0
        %606 = vmatpush2.msra.mxu0 0.0
        %607 = vmatprep.subr.mxu0 0.0
        %608 = vmatpush2.msra.mxu0 0.0
        %609 = vmatprep.subr.mxu0 0.0
        %610 = vmatpush2.msra.mxu0 0.0
        %611 = vmatprep.subr.mxu0 0.0
        %612 = vmatpush2.msra.mxu0 0.0
        %613 = vmatprep.subr.mxu0 0.0
        %614 = vmatpush2.msra.mxu0 0.0
        %615 = vmatprep.subr.mxu0 0.0
        %616 = vmatpush2.msra.mxu0 0.0
        %617 = vmatprep.mubr.f32.mxu0 0.0
        %618 = vmatmul.mubr.f32.gmra.mxu0 %v551
        %v619 = vpop.f32.mrf.mxu0
        %v620 = vadd.f32 0.0, %v619
        %v621 = vpop.f32.mrf.mxu0
        %622 = vdwg.mxu0
        %p623 = scmp.eq.s32.totalorder %s30, 0
        // Predicated region
        $region45: #{tpu_custom_call.1} parent=39 // pred_check
          %p624 = pneg %p623
        $region46: #{tpu_custom_call.1} parent=39 // pred_check_branch
          %626 = sbr.rel (%p624) target = $region48
        $region47: #{tpu_custom_call.1} parent=39 // pred_region
          %v627 = vld [vmem:[%s4] sm:$0x1]
          %v629 = vlaneseq
          %v630 = vshrl.u32 %v629, 7
          %v631 = vsub.s32 0, %v630
          %v632 = vrot.slane %v627, %v631
          %v634 = vadd.f32 %v620, %v632
          %s635 = scalar_lea.vmem %s269, %s376 [#allocation3]
          %vm636 = vcmask 261120
          %637 = vst.msk [vmem:[%s635] sm:$0xff] %vm636, %v634
        $region48: #{tpu_custom_call.1} parent=39 // pred_fallthru
          _
        %p638 = scmp.ne.s32.totalorder %s30, 0
        // Predicated region
        $region49: #{tpu_custom_call.1} parent=39 // pred_check
          %p639 = pneg %p638
        $region50: #{tpu_custom_call.1} parent=39 // pred_check_branch
          %641 = sbr.rel (%p639) target = $region52
        $region51: #{tpu_custom_call.1} parent=39 // pred_region
          %s642 = scalar_lea.vmem %s269, %s376 [#allocation3]
          %v643 = vld [vmem:[%s642] sm:$0xff]
          %v644 = vadd.f32 %v643, %v620
          %vm645 = vcmask 261120
          %646 = vst.msk [vmem:[%s642] sm:$0xff] %vm645, %v644
        $region52: #{tpu_custom_call.1} parent=39 // pred_fallthru
          _
        %s647 = sand.u32 %s161, 1
        %s648 = scalar_lea.sflag [#allocation4], %s647
        %s649 = sand.u32 %s161, 1
        %s650 = smul.addr %s649, 8
        %s651 = scalar_lea.vmem [#allocation3], %s650
        %s652 = sand.u32 %s191, 1
        %s653 = scalar_lea.sflag [#allocation6], %s652
        %s654 = sand.u32 %s191, 1
        %s655 = smul.addr %s654, 8
        %s656 = scalar_lea.vmem [#allocation5], %s655
        // Predicated region
        $region53: #{tpu_custom_call.1} parent=39 // pred_check
          %p657 = pneg %p171
        $region54: #{tpu_custom_call.1} parent=39 // pred_check_branch
          %659 = sbr.rel (%p657) target = $region56
        $region55: #{tpu_custom_call.1} parent=39 // pred_region
          %s661 = ssub.s32 128, 128
          %662 = vsyncadd %s648, %s661
          %s663 = smul.addr %s29, 128
          %s664 = scalar_lea.hbm %s5, %s663
          %s666 = sshll.u32 %s651, 4
          %s667 = int_to_ptr.vmem [resolvable:$true] %s666
          %669 = dma.vmem_to_hbm [thread:$0]  %s667, 128, %s664, %s648
        $region56: #{tpu_custom_call.1} parent=39 // pred_fallthru
          _
        // Predicated region
        $region57: #{tpu_custom_call.1} parent=39 // pred_check
          %p670 = pneg %p201
        $region58: #{tpu_custom_call.1} parent=39 // pred_check_branch
          %672 = sbr.rel (%p670) target = $region60
        $region59: #{tpu_custom_call.1} parent=39 // pred_region
          %s674 = ssub.s32 128, 128
          %675 = vsyncadd %s653, %s674
          %s676 = sadd.s32 %s31, %s30
          %s677 = smul.addr %s29, 4
          %s678 = sadd.s32 %s676, %s677
          %s679 = smul.addr %s678, 128
          %s680 = scalar_lea.hbm %s6, %s679
          %s682 = sshll.u32 %s656, 4
          %s683 = int_to_ptr.vmem [resolvable:$true] %s682
          %685 = dma.vmem_to_hbm [thread:$0]  %s683, 128, %s680, %s653
        $region60: #{tpu_custom_call.1} parent=39 // pred_fallthru
          _
      $region40: #{tpu_custom_call.1} parent=5 // pred_fallthru
        _
      %p686 = scmp.le.s32.totalorder 2, %s19
      // Predicated region
      $region61: #{tpu_custom_call.1} parent=5 // pred_check
        %p687 = pneg %p686
      $region62: #{tpu_custom_call.1} parent=5 // pred_check_branch
        %689 = sbr.rel (%p687) target = $region64
      $region63: #{tpu_custom_call.1} parent=5 // pred_region
        %s690 = ssub.s32 %s19, 2
        // Predicated region
        $region65: #{tpu_custom_call.1} parent=63 // pred_check
          %p691 = pneg %p177
        $region66: #{tpu_custom_call.1} parent=63 // pred_check_branch
          %693 = sbr.rel (%p691) target = $region68
        $region67: #{tpu_custom_call.1} parent=63 // pred_region
          %s694 = sand.u32 %s162, 1
          %s695 = scalar_lea.sflag [#allocation4], %s694
          %s696 = sand.u32 %s162, 1
          %s697 = smul.addr %s696, 8
          %s698 = scalar_lea.vmem [#allocation3], %s697
          %699 = dma.done %s695, 128
        $region68: #{tpu_custom_call.1} parent=63 // pred_fallthru
          _
        // Predicated region
        $region69: #{tpu_custom_call.1} parent=63 // pred_check
          %p700 = pneg %p207
        $region70: #{tpu_custom_call.1} parent=63 // pred_check_branch
          %702 = sbr.rel (%p700) target = $region72
        $region71: #{tpu_custom_call.1} parent=63 // pred_region
          %s703 = sand.u32 %s192, 1
          %s704 = scalar_lea.sflag [#allocation6], %s703
          %s705 = sand.u32 %s192, 1
          %s706 = smul.addr %s705, 8
          %s707 = scalar_lea.vmem [#allocation5], %s706
          %708 = dma.done %s704, 128
        $region72: #{tpu_custom_call.1} parent=63 // pred_fallthru
          _
      $region64: #{tpu_custom_call.1} parent=5 // pred_fallthru
        _
    $region6: #{tpu_custom_call.1} parent=1 // loop_footer
      %s23 = sadd.s32 1, %s19
    $region7: #{tpu_custom_call.1} parent=1 // loop_footer_branch
      %18 = sbr.rel target = $region3
    $region8: #{tpu_custom_call.1} parent=1 // loop_exit
      _
    %709 = vsyncpa [#allocation4], 1
    %s710 = scalar_lea.sflag [#allocation4], 1
    %711 = vsyncpa %s710, 1
    %712 = vsyncpa [#allocation6], 1
    %s713 = scalar_lea.sflag [#allocation6], 1
    %714 = vsyncpa %s713, 1

</llo_original>
